<compile_context>
chip_gen: v5e
topology: v5e:2x2
jax: 0.10.0
libtpu: 0.0.40
codegen_flags: <defaults>
</compile_context>

<pallas_src>
import functools

import numpy as np

import jax
import jax.numpy as jnp
from jax import lax
from jax.experimental import pallas as pl
from jax.experimental.pallas import tpu as pltpu


def _round_up(v, m):
    return ((v + m - 1) // m) * m


def _build_tap_masks(H, W, HWP, k):
    """Host-side 0/1 validity mask per conv tap in the flattened/padded (HWP) domain."""
    p = (k - 1) // 2
    t = np.arange(H * W)
    r = t // W
    c = t % W
    masks = np.zeros((k * k, HWP), np.float32)
    for di in range(k):
        for dj in range(k):
            valid = ((r + di >= p) & (r + di < H + p) &
                     (c + dj >= p) & (c + dj < W + p))
            masks[di * k + dj, :H * W] = valid.astype(np.float32)
    return masks


def _pick_batch_group(N):
    """Batches packed per grid step (2 sublanes of the {mean,max} maps per batch)."""
    if N >= 4:
        return 4
    if N >= 2:
        return 2
    return 1


def _pick_channel_chunk(C, NB, HWP, itemsize):
    """Channels per grid step: multiple of 8 (or the full extent when C<=8),
    large enough to amortize the ~600-cycle per-step overhead, small enough that
    the double-buffered input block stays under ~12 MiB (v7x-safe)."""
    if C <= 8:
        return C
    max_rows = max(8, (12 * 2**20) // (2 * NB * HWP * itemsize))
    tc = min(_round_up(C, 8), 128, max_rows)
    return max(8, (tc // 8) * 8)


def spatial_attention_kernel(wm_ref, x_ref, o_ref, sum_ref, max_ref, maps_ref,
                             *, k, W, C, TC, G, NB, HWP, has_cpad):
    """Grid = (batch-group, channel-chunk); channel-chunk is the trailing reduction axis.

    wm_ref   : VMEM (k*k, 2*NB, HWP)  conv weights folded into tap validity masks
                                      (row 2b -> mean weight, row 2b+1 -> max weight)
    x_ref    : VMEM (NB, TC, HWP)     lane-dense input chunk (NB batches packed)
    o_ref    : VMEM (NB, 1, HWP)      lane-dense output block
    sum_ref  : VMEM (NB, G, HWP)      running per-sublane channel sums   (scratch)
    max_ref  : VMEM (NB, G, HWP)      running per-sublane channel maxes  (scratch)
    maps_ref : VMEM (2*NB, HWP)       packed {mean, max} maps            (scratch)
    """
    p = (k - 1) // 2
    c_idx = pl.program_id(1)
    n_chunks = pl.num_programs(1)

    @pl.when(c_idx == 0)
    def _init():
        sum_ref[...] = jnp.zeros_like(sum_ref)
        max_ref[...] = jnp.full_like(max_ref, -jnp.inf)

    # ---- streamed channel reduction: dense (NB, G, HWP) slab ops (VPU only) ----
    s = sum_ref[...]
    m = max_ref[...]
    for g in range(TC // G):                                   # static, small unroll
        slab = x_ref[:, g * G:(g + 1) * G, :].astype(jnp.float32)
        s = s + slab                                           # zero-padded channels add 0
        if has_cpad:
            ch = c_idx * TC + g * G + lax.broadcasted_iota(jnp.int32, slab.shape, 1)
            slab = jnp.where(ch < C, slab, -jnp.inf)           # mask pad rows out of max
        m = jnp.maximum(m, slab)
    sum_ref[...] = s
    max_ref[...] = m

    # ---- after last chunk: 2->1 k x k 'same' conv (roll + weighted masks) + sigmoid ----
    @pl.when(c_idx == n_chunks - 1)
    def _finalize():
        inv_c = 1.0 / C
        # Collapse sublanes once (XLU) and pack NB x {mean, max} into (2*NB, HWP).
        for b in range(NB):
            maps_ref[2 * b:2 * b + 1, :] = (
                jnp.sum(sum_ref[b], axis=0, keepdims=True) * inv_c)
            maps_ref[2 * b + 1:2 * b + 2, :] = (
                jnp.max(max_ref[b], axis=0, keepdims=True))
        maps = maps_ref[...]

        acc = jnp.zeros((2 * NB, HWP), jnp.float32)
        for di in range(k):
            for dj in range(k):
                t = di * k + dj
                off = (di - p) * W + (dj - p)
                # One lane-roll (XLU) per tap serves all packed batches and both input
                # channels; the weighted mask carries both the conv weight and the
                # 'same'-padding / row-wrap / spatial-pad validity.
                sh = pltpu.roll(maps, shift=(-off) % HWP, axis=1)
                acc = acc + wm_ref[t] * sh

        for b in range(NB):
            z = acc[2 * b:2 * b + 1, :] + acc[2 * b + 1:2 * b + 2, :]
            # sigmoid(z) = 0.5 * (1 + tanh(z / 2)): one EUP op, no VALU divide.
            o_ref[b, :, :] = (0.5 + 0.5 * jnp.tanh(0.5 * z)).astype(o_ref.dtype)


def spatial_attention(x, weight, kernel_size):
    """x: (N, C, H, W).  weight: (1, 2, k, k) (no bias).  Returns (N, 1, H, W)."""
    N, C, H, W = x.shape
    k = kernel_size
    assert k % 2 == 1, "Odd kernel size required"
    HW = H * W
    HWP = _round_up(max(HW, 128), 128)        # lane-dense, unmasked full-lane stores

    NB = _pick_batch_group(N)
    N_pad = _round_up(N, NB)

    itemsize = jnp.dtype(x.dtype).itemsize
    TC = _pick_channel_chunk(C, NB, HWP, itemsize)
    C_pad = _round_up(C, TC)
    n_chunks = C_pad // TC
    G = min(TC, 8)
    has_cpad = C_pad != C

    # Lane-dense flatten + zero padding. Padded channels contribute 0 to the sum
    # (mean divides by the true C) and are masked out of the max in-kernel; padded
    # batches / spatial positions are sliced off below.
    x_flat = x.reshape(N, C, HW)
    x_flat = jnp.pad(x_flat, ((0, N_pad - N), (0, C_pad - C), (0, HWP - HW)))

    # Fold conv weights into the tap masks: (k*k, 2*NB, HWP).
    masks = jnp.asarray(_build_tap_masks(H, W, HWP, k))            # (k*k, HWP)
    w = weight.reshape(2, k * k).astype(jnp.float32)               # [in_ch, tap]
    wm = masks[:, None, :] * jnp.transpose(w)[:, :, None]          # (k*k, 2, HWP)
    wm = jnp.tile(wm, (1, NB, 1))                                  # (k*k, 2*NB, HWP)

    kern = functools.partial(spatial_attention_kernel, k=k, W=W, C=C, TC=TC,
                             G=G, NB=NB, HWP=HWP, has_cpad=has_cpad)

    x_spec_kwargs = {}
    if n_chunks >= 3:
        # Per-chunk compute is a handful of VALU ops; keep chunk c+2's fetch in flight.
        x_spec_kwargs["pipeline_mode"] = pl.Buffered(3)
    x_spec = pl.BlockSpec((NB, TC, HWP), lambda n, c: (n, c, 0), **x_spec_kwargs)

    vmem_bytes = (3 * NB * TC * HWP * itemsize             # input stream (<=3 buffers)
                  + 2 * NB * HWP * itemsize                # output
                  + 2 * (k * k) * 2 * NB * HWP * 4         # weighted tap masks
                  + (2 * NB * G + 2 * NB) * HWP * 4)       # scratches
    vmem_limit = int(min(64 * 2**20, max(32 * 2**20, 2 * vmem_bytes)))

    out_flat = pl.pallas_call(
        kern,
        out_shape=jax.ShapeDtypeStruct((N_pad, 1, HWP), x.dtype),
        grid_spec=pltpu.PrefetchScalarGridSpec(
            num_scalar_prefetch=0,
            grid=(N_pad // NB, n_chunks),                           # reduction axis last
            in_specs=[
                pl.BlockSpec((k * k, 2 * NB, HWP), lambda n, c: (0, 0, 0)),
                x_spec,
            ],
            out_specs=pl.BlockSpec((NB, 1, HWP), lambda n, c: (n, 0, 0)),
            scratch_shapes=[
                pltpu.VMEM((NB, G, HWP), jnp.float32),     # running channel sums
                pltpu.VMEM((NB, G, HWP), jnp.float32),     # running channel maxes
                pltpu.VMEM((2 * NB, HWP), jnp.float32),    # packed {mean, max} maps
            ],
        ),
        compiler_params=pltpu.CompilerParams(
            dimension_semantics=("parallel", "arbitrary"),  # shard batch groups on v7x
            vmem_limit_bytes=vmem_limit,
        ),
    )(wm, x_flat)

    return out_flat[:N, :, :HW].reshape(N, 1, H, W)


def _reference(x, weight):
    """Pure-JAX reference matching the PyTorch forward."""
    avg = jnp.mean(x, axis=1, keepdims=True)
    mx = jnp.max(x, axis=1, keepdims=True)
    cat = jnp.concatenate([avg, mx], axis=1)                # (N, 2, H, W)
    k = weight.shape[-1]
    p = (k - 1) // 2
    y = jax.lax.conv_general_dilated(
        cat, weight,
        window_strides=(1, 1),
        padding=((p, p), (p, p)),
        dimension_numbers=("NCHW", "OIHW", "NCHW"),
    )
    return jax.nn.sigmoid(y)


if __name__ == "__main__":
    kernel_size = 7
    N, C, H, W = 2, 4, 16, 16

    key = jax.random.PRNGKey(0)
    kx, kw = jax.random.split(key)
    x = jax.random.normal(kx, (N, C, H, W), dtype=jnp.float32)
    weight = 0.1 * jax.random.normal(kw, (1, 2, kernel_size, kernel_size),
                                     dtype=jnp.float32)

    out = jax.block_until_ready(spatial_attention(x, weight, kernel_size))
    ref = jax.block_until_ready(_reference(x, weight))

    assert out.shape == (N, 1, H, W)
    assert jnp.allclose(out, ref, atol=1e-5, rtol=1e-5), (
        f"max abs err {jnp.max(jnp.abs(out - ref))}"
    )
    print("KERNEL_OK")
</pallas_src>

<mosaic_0001>
module attributes {stable_mosaic.version = 11 : i64} {
  func.func @spatial_attention_kernel(%arg0: i32, %arg1: i32, %arg2: memref<49x4x256xf32, #tpu.memory_space<vmem>>, %arg3: memref<2x4x256xf32, #tpu.memory_space<vmem>>, %arg4: memref<2x1x256xf32, #tpu.memory_space<vmem>>, %arg5: memref<2x4x256xf32, #tpu.memory_space<vmem>>, %arg6: memref<2x4x256xf32, #tpu.memory_space<vmem>>, %arg7: memref<4x256xf32, #tpu.memory_space<vmem>>) attributes {dimension_semantics = [#tpu.dimension_semantics<parallel>, #tpu.dimension_semantics<arbitrary>], iteration_bounds = array<i64: 1, 1>, scalar_prefetch = 0 : i64, scratch_operands = 3 : i64, tpu.core_type = #tpu.core_type<tc>, window_params = [{pipeline_mode = #tpu.pipeline_mode<synchronous>, transform_indices = @transform_0, window_bounds = array<i64: 49, 4, 256>}, {transform_indices = @transform_1, window_bounds = array<i64: 2, 4, 256>}, {transform_indices = @transform_2, window_bounds = array<i64: 2, 1, 256>}]} {
    %c0_i32 = arith.constant 0 : i32
    %0 = arith.cmpi eq, %arg1, %c0_i32 : i32
    %1 = arith.extui %0 : i1 to i32
    %c0_i32_0 = arith.constant 0 : i32
    %2 = arith.cmpi ne, %1, %c0_i32_0 : i32
    scf.if %2 {
      %cst = arith.constant 0.000000e+00 : f32
      %13 = vector.broadcast %cst : f32 to vector<2x4x256xf32>
      %c0_17 = arith.constant 0 : index
      %c0_18 = arith.constant 0 : index
      %c0_19 = arith.constant 0 : index
      %14 = vector.load %arg5[%c0_17, %c0_18, %c0_19] : memref<2x4x256xf32, #tpu.memory_space<vmem>>, vector<2x4x256xf32>
      tpu.vector_store %arg5[%c0_17, %c0_18, %c0_19], %13 {strides = array<i32>} : memref<2x4x256xf32, #tpu.memory_space<vmem>>, vector<2x4x256xf32>,
      %cst_20 = arith.constant 0xFF800000 : f32
      %15 = vector.broadcast %cst_20 : f32 to vector<2x4x256xf32>
      %c0_21 = arith.constant 0 : index
      %c0_22 = arith.constant 0 : index
      %c0_23 = arith.constant 0 : index
      %16 = vector.load %arg6[%c0_21, %c0_22, %c0_23] : memref<2x4x256xf32, #tpu.memory_space<vmem>>, vector<2x4x256xf32>
      tpu.vector_store %arg6[%c0_21, %c0_22, %c0_23], %15 {strides = array<i32>} : memref<2x4x256xf32, #tpu.memory_space<vmem>>, vector<2x4x256xf32>,
    } else {
    }
    %c0 = arith.constant 0 : index
    %c0_1 = arith.constant 0 : index
    %c0_2 = arith.constant 0 : index
    %3 = vector.load %arg5[%c0, %c0_1, %c0_2] : memref<2x4x256xf32, #tpu.memory_space<vmem>>, vector<2x4x256xf32>
    %c0_3 = arith.constant 0 : index
    %c0_4 = arith.constant 0 : index
    %c0_5 = arith.constant 0 : index
    %4 = vector.load %arg6[%c0_3, %c0_4, %c0_5] : memref<2x4x256xf32, #tpu.memory_space<vmem>>, vector<2x4x256xf32>
    %c0_6 = arith.constant 0 : index
    %c0_7 = arith.constant 0 : index
    %c0_8 = arith.constant 0 : index
    %5 = vector.load %arg3[%c0_6, %c0_7, %c0_8] : memref<2x4x256xf32, #tpu.memory_space<vmem>>, vector<2x4x256xf32>
    %6 = arith.addf %3, %5 : vector<2x4x256xf32>
    %7 = arith.maximumf %4, %5 : vector<2x4x256xf32>
    %c0_9 = arith.constant 0 : index
    %c0_10 = arith.constant 0 : index
    %c0_11 = arith.constant 0 : index
    %8 = vector.load %arg5[%c0_9, %c0_10, %c0_11] : memref<2x4x256xf32, #tpu.memory_space<vmem>>, vector<2x4x256xf32>
    tpu.vector_store %arg5[%c0_9, %c0_10, %c0_11], %6 {strides = array<i32>} : memref<2x4x256xf32, #tpu.memory_space<vmem>>, vector<2x4x256xf32>,
    %c0_12 = arith.constant 0 : index
    %c0_13 = arith.constant 0 : index
    %c0_14 = arith.constant 0 : index
    %9 = vector.load %arg6[%c0_12, %c0_13, %c0_14] : memref<2x4x256xf32, #tpu.memory_space<vmem>>, vector<2x4x256xf32>
    tpu.vector_store %arg6[%c0_12, %c0_13, %c0_14], %7 {strides = array<i32>} : memref<2x4x256xf32, #tpu.memory_space<vmem>>, vector<2x4x256xf32>,
    %c0_i32_15 = arith.constant 0 : i32
    %10 = arith.cmpi eq, %arg1, %c0_i32_15 : i32
    %11 = arith.extui %10 : i1 to i32
    %c0_i32_16 = arith.constant 0 : i32
    %12 = arith.cmpi ne, %11, %c0_i32_16 : i32
    scf.if %12 {
      %c0_17 = arith.constant 0 : index
      %c0_18 = arith.constant 0 : index
      %c0_19 = arith.constant 0 : index
      %13 = vector.load %arg5[%c0_17, %c0_18, %c0_19] : memref<2x4x256xf32, #tpu.memory_space<vmem>>, vector<1x4x256xf32>
      %14 = vector.shape_cast %13 : vector<1x4x256xf32> to vector<4x256xf32>
      %cst = arith.constant dense<0.000000e+00> : vector<256xf32>
      %15 = vector.multi_reduction <add>, %14, %cst [0] : vector<4x256xf32> to vector<256xf32>
      %16 = vector.shape_cast %15 : vector<256xf32> to vector<1x256xf32>
      %cst_20 = arith.constant 2.500000e-01 : f32
      %17 = vector.broadcast %cst_20 : f32 to vector<1x256xf32>
      %18 = arith.mulf %16, %17 : vector<1x256xf32>
      %c0_21 = arith.constant 0 : index
      %c0_22 = arith.constant 0 : index
      %19 = vector.load %arg7[%c0_21, %c0_22] : memref<4x256xf32, #tpu.memory_space<vmem>>, vector<1x256xf32>
      tpu.vector_store %arg7[%c0_21, %c0_22], %18 {strides = array<i32>} : memref<4x256xf32, #tpu.memory_space<vmem>>, vector<1x256xf32>,
      %c0_23 = arith.constant 0 : index
      %c0_24 = arith.constant 0 : index
      %c0_25 = arith.constant 0 : index
      %20 = vector.load %arg6[%c0_23, %c0_24, %c0_25] : memref<2x4x256xf32, #tpu.memory_space<vmem>>, vector<1x4x256xf32>
      %21 = vector.shape_cast %20 : vector<1x4x256xf32> to vector<4x256xf32>
      %cst_26 = arith.constant dense<0xFF800000> : vector<256xf32>
      %22 = vector.multi_reduction <maximumf>, %21, %cst_26 [0] : vector<4x256xf32> to vector<256xf32>
      %23 = vector.shape_cast %22 : vector<256xf32> to vector<1x256xf32>
      %c1 = arith.constant 1 : index
      %c0_27 = arith.constant 0 : index
      %24 = vector.load %arg7[%c1, %c0_27] : memref<4x256xf32, #tpu.memory_space<vmem>>, vector<1x256xf32>
      tpu.vector_store %arg7[%c1, %c0_27], %23 {strides = array<i32>} : memref<4x256xf32, #tpu.memory_space<vmem>>, vector<1x256xf32>,
      %c1_28 = arith.constant 1 : index
      %c0_29 = arith.constant 0 : index
      %c0_30 = arith.constant 0 : index
      %25 = vector.load %arg5[%c1_28, %c0_29, %c0_30] : memref<2x4x256xf32, #tpu.memory_space<vmem>>, vector<1x4x256xf32>
      %26 = vector.shape_cast %25 : vector<1x4x256xf32> to vector<4x256xf32>
      %cst_31 = arith.constant dense<0.000000e+00> : vector<256xf32>
      %27 = vector.multi_reduction <add>, %26, %cst_31 [0] : vector<4x256xf32> to vector<256xf32>
      %28 = vector.shape_cast %27 : vector<256xf32> to vector<1x256xf32>
      %cst_32 = arith.constant 2.500000e-01 : f32
      %29 = vector.broadcast %cst_32 : f32 to vector<1x256xf32>
      %30 = arith.mulf %28, %29 : vector<1x256xf32>
      %c2 = arith.constant 2 : index
      %c0_33 = arith.constant 0 : index
      %31 = vector.load %arg7[%c2, %c0_33] : memref<4x256xf32, #tpu.memory_space<vmem>>, vector<1x256xf32>
      tpu.vector_store %arg7[%c2, %c0_33], %30 {strides = array<i32>} : memref<4x256xf32, #tpu.memory_space<vmem>>, vector<1x256xf32>,
      %c1_34 = arith.constant 1 : index
      %c0_35 = arith.constant 0 : index
      %c0_36 = arith.constant 0 : index
      %32 = vector.load %arg6[%c1_34, %c0_35, %c0_36] : memref<2x4x256xf32, #tpu.memory_space<vmem>>, vector<1x4x256xf32>
      %33 = vector.shape_cast %32 : vector<1x4x256xf32> to vector<4x256xf32>
      %cst_37 = arith.constant dense<0xFF800000> : vector<256xf32>
      %34 = vector.multi_reduction <maximumf>, %33, %cst_37 [0] : vector<4x256xf32> to vector<256xf32>
      %35 = vector.shape_cast %34 : vector<256xf32> to vector<1x256xf32>
      %c3 = arith.constant 3 : index
      %c0_38 = arith.constant 0 : index
      %36 = vector.load %arg7[%c3, %c0_38] : memref<4x256xf32, #tpu.memory_space<vmem>>, vector<1x256xf32>
      tpu.vector_store %arg7[%c3, %c0_38], %35 {strides = array<i32>} : memref<4x256xf32, #tpu.memory_space<vmem>>, vector<1x256xf32>,
      %c0_39 = arith.constant 0 : index
      %c0_40 = arith.constant 0 : index
      %37 = vector.load %arg7[%c0_39, %c0_40] : memref<4x256xf32, #tpu.memory_space<vmem>>, vector<4x256xf32>
      %cst_41 = arith.constant 0.000000e+00 : f32
      %38 = vector.broadcast %cst_41 : f32 to vector<4x256xf32>
      %c51_i32 = arith.constant 51 : i32
      %39 = tpu.dynamic_rotate %37 by %c51_i32 dim 1 : vector<4x256xf32>, i32 -> vector<4x256xf32>
      %c0_42 = arith.constant 0 : index
      %c0_43 = arith.constant 0 : index
      %c0_44 = arith.constant 0 : index
      %40 = vector.load %arg2[%c0_42, %c0_43, %c0_44] : memref<49x4x256xf32, #tpu.memory_space<vmem>>, vector<1x4x256xf32>
      %41 = vector.shape_cast %40 : vector<1x4x256xf32> to vector<4x256xf32>
      %42 = arith.mulf %41, %39 : vector<4x256xf32>
      %43 = arith.addf %38, %42 : vector<4x256xf32>
      %c50_i32 = arith.constant 50 : i32
      %44 = tpu.dynamic_rotate %37 by %c50_i32 dim 1 : vector<4x256xf32>, i32 -> vector<4x256xf32>
      %c1_45 = arith.constant 1 : index
      %c0_46 = arith.constant 0 : index
      %c0_47 = arith.constant 0 : index
      %45 = vector.load %arg2[%c1_45, %c0_46, %c0_47] : memref<49x4x256xf32, #tpu.memory_space<vmem>>, vector<1x4x256xf32>
      %46 = vector.shape_cast %45 : vector<1x4x256xf32> to vector<4x256xf32>
      %47 = arith.mulf %46, %44 : vector<4x256xf32>
      %48 = arith.addf %43, %47 : vector<4x256xf32>
      %c49_i32 = arith.constant 49 : i32
      %49 = tpu.dynamic_rotate %37 by %c49_i32 dim 1 : vector<4x256xf32>, i32 -> vector<4x256xf32>
      %c2_48 = arith.constant 2 : index
      %c0_49 = arith.constant 0 : index
      %c0_50 = arith.constant 0 : index
      %50 = vector.load %arg2[%c2_48, %c0_49, %c0_50] : memref<49x4x256xf32, #tpu.memory_space<vmem>>, vector<1x4x256xf32>
      %51 = vector.shape_cast %50 : vector<1x4x256xf32> to vector<4x256xf32>
      %52 = arith.mulf %51, %49 : vector<4x256xf32>
      %53 = arith.addf %48, %52 : vector<4x256xf32>
      %c48_i32 = arith.constant 48 : i32
      %54 = tpu.dynamic_rotate %37 by %c48_i32 dim 1 : vector<4x256xf32>, i32 -> vector<4x256xf32>
      %c3_51 = arith.constant 3 : index
      %c0_52 = arith.constant 0 : index
      %c0_53 = arith.constant 0 : index
      %55 = vector.load %arg2[%c3_51, %c0_52, %c0_53] : memref<49x4x256xf32, #tpu.memory_space<vmem>>, vector<1x4x256xf32>
      %56 = vector.shape_cast %55 : vector<1x4x256xf32> to vector<4x256xf32>
      %57 = arith.mulf %56, %54 : vector<4x256xf32>
      %58 = arith.addf %53, %57 : vector<4x256xf32>
      %c47_i32 = arith.constant 47 : i32
      %59 = tpu.dynamic_rotate %37 by %c47_i32 dim 1 : vector<4x256xf32>, i32 -> vector<4x256xf32>
      %c4 = arith.constant 4 : index
      %c0_54 = arith.constant 0 : index
      %c0_55 = arith.constant 0 : index
      %60 = vector.load %arg2[%c4, %c0_54, %c0_55] : memref<49x4x256xf32, #tpu.memory_space<vmem>>, vector<1x4x256xf32>
      %61 = vector.shape_cast %60 : vector<1x4x256xf32> to vector<4x256xf32>
      %62 = arith.mulf %61, %59 : vector<4x256xf32>
      %63 = arith.addf %58, %62 : vector<4x256xf32>
      %c46_i32 = arith.constant 46 : i32
      %64 = tpu.dynamic_rotate %37 by %c46_i32 dim 1 : vector<4x256xf32>, i32 -> vector<4x256xf32>
      %c5 = arith.constant 5 : index
      %c0_56 = arith.constant 0 : index
      %c0_57 = arith.constant 0 : index
      %65 = vector.load %arg2[%c5, %c0_56, %c0_57] : memref<49x4x256xf32, #tpu.memory_space<vmem>>, vector<1x4x256xf32>
      %66 = vector.shape_cast %65 : vector<1x4x256xf32> to vector<4x256xf32>
      %67 = arith.mulf %66, %64 : vector<4x256xf32>
      %68 = arith.addf %63, %67 : vector<4x256xf32>
      %c45_i32 = arith.constant 45 : i32
      %69 = tpu.dynamic_rotate %37 by %c45_i32 dim 1 : vector<4x256xf32>, i32 -> vector<4x256xf32>
      %c6 = arith.constant 6 : index
      %c0_58 = arith.constant 0 : index
      %c0_59 = arith.constant 0 : index
      %70 = vector.load %arg2[%c6, %c0_58, %c0_59] : memref<49x4x256xf32, #tpu.memory_space<vmem>>, vector<1x4x256xf32>
      %71 = vector.shape_cast %70 : vector<1x4x256xf32> to vector<4x256xf32>
      %72 = arith.mulf %71, %69 : vector<4x256xf32>
      %73 = arith.addf %68, %72 : vector<4x256xf32>
      %c35_i32 = arith.constant 35 : i32
      %74 = tpu.dynamic_rotate %37 by %c35_i32 dim 1 : vector<4x256xf32>, i32 -> vector<4x256xf32>
      %c7 = arith.constant 7 : index
      %c0_60 = arith.constant 0 : index
      %c0_61 = arith.constant 0 : index
      %75 = vector.load %arg2[%c7, %c0_60, %c0_61] : memref<49x4x256xf32, #tpu.memory_space<vmem>>, vector<1x4x256xf32>
      %76 = vector.shape_cast %75 : vector<1x4x256xf32> to vector<4x256xf32>
      %77 = arith.mulf %76, %74 : vector<4x256xf32>
      %78 = arith.addf %73, %77 : vector<4x256xf32>
      %c34_i32 = arith.constant 34 : i32
      %79 = tpu.dynamic_rotate %37 by %c34_i32 dim 1 : vector<4x256xf32>, i32 -> vector<4x256xf32>
      %c8 = arith.constant 8 : index
      %c0_62 = arith.constant 0 : index
      %c0_63 = arith.constant 0 : index
      %80 = vector.load %arg2[%c8, %c0_62, %c0_63] : memref<49x4x256xf32, #tpu.memory_space<vmem>>, vector<1x4x256xf32>
      %81 = vector.shape_cast %80 : vector<1x4x256xf32> to vector<4x256xf32>
      %82 = arith.mulf %81, %79 : vector<4x256xf32>
      %83 = arith.addf %78, %82 : vector<4x256xf32>
      %c33_i32 = arith.constant 33 : i32
      %84 = tpu.dynamic_rotate %37 by %c33_i32 dim 1 : vector<4x256xf32>, i32 -> vector<4x256xf32>
      %c9 = arith.constant 9 : index
      %c0_64 = arith.constant 0 : index
      %c0_65 = arith.constant 0 : index
      %85 = vector.load %arg2[%c9, %c0_64, %c0_65] : memref<49x4x256xf32, #tpu.memory_space<vmem>>, vector<1x4x256xf32>
      %86 = vector.shape_cast %85 : vector<1x4x256xf32> to vector<4x256xf32>
      %87 = arith.mulf %86, %84 : vector<4x256xf32>
      %88 = arith.addf %83, %87 : vector<4x256xf32>
      %c32_i32 = arith.constant 32 : i32
      %89 = tpu.dynamic_rotate %37 by %c32_i32 dim 1 : vector<4x256xf32>, i32 -> vector<4x256xf32>
      %c10 = arith.constant 10 : index
      %c0_66 = arith.constant 0 : index
      %c0_67 = arith.constant 0 : index
      %90 = vector.load %arg2[%c10, %c0_66, %c0_67] : memref<49x4x256xf32, #tpu.memory_space<vmem>>, vector<1x4x256xf32>
      %91 = vector.shape_cast %90 : vector<1x4x256xf32> to vector<4x256xf32>
      %92 = arith.mulf %91, %89 : vector<4x256xf32>
      %93 = arith.addf %88, %92 : vector<4x256xf32>
      %c31_i32 = arith.constant 31 : i32
      %94 = tpu.dynamic_rotate %37 by %c31_i32 dim 1 : vector<4x256xf32>, i32 -> vector<4x256xf32>
      %c11 = arith.constant 11 : index
      %c0_68 = arith.constant 0 : index
      %c0_69 = arith.constant 0 : index
      %95 = vector.load %arg2[%c11, %c0_68, %c0_69] : memref<49x4x256xf32, #tpu.memory_space<vmem>>, vector<1x4x256xf32>
      %96 = vector.shape_cast %95 : vector<1x4x256xf32> to vector<4x256xf32>
      %97 = arith.mulf %96, %94 : vector<4x256xf32>
      %98 = arith.addf %93, %97 : vector<4x256xf32>
      %c30_i32 = arith.constant 30 : i32
      %99 = tpu.dynamic_rotate %37 by %c30_i32 dim 1 : vector<4x256xf32>, i32 -> vector<4x256xf32>
      %c12 = arith.constant 12 : index
      %c0_70 = arith.constant 0 : index
      %c0_71 = arith.constant 0 : index
      %100 = vector.load %arg2[%c12, %c0_70, %c0_71] : memref<49x4x256xf32, #tpu.memory_space<vmem>>, vector<1x4x256xf32>
      %101 = vector.shape_cast %100 : vector<1x4x256xf32> to vector<4x256xf32>
      %102 = arith.mulf %101, %99 : vector<4x256xf32>
      %103 = arith.addf %98, %102 : vector<4x256xf32>
      %c29_i32 = arith.constant 29 : i32
      %104 = tpu.dynamic_rotate %37 by %c29_i32 dim 1 : vector<4x256xf32>, i32 -> vector<4x256xf32>
      %c13 = arith.constant 13 : index
      %c0_72 = arith.constant 0 : index
      %c0_73 = arith.constant 0 : index
      %105 = vector.load %arg2[%c13, %c0_72, %c0_73] : memref<49x4x256xf32, #tpu.memory_space<vmem>>, vector<1x4x256xf32>
      %106 = vector.shape_cast %105 : vector<1x4x256xf32> to vector<4x256xf32>
      %107 = arith.mulf %106, %104 : vector<4x256xf32>
      %108 = arith.addf %103, %107 : vector<4x256xf32>
      %c19_i32 = arith.constant 19 : i32
      %109 = tpu.dynamic_rotate %37 by %c19_i32 dim 1 : vector<4x256xf32>, i32 -> vector<4x256xf32>
      %c14 = arith.constant 14 : index
      %c0_74 = arith.constant 0 : index
      %c0_75 = arith.constant 0 : index
      %110 = vector.load %arg2[%c14, %c0_74, %c0_75] : memref<49x4x256xf32, #tpu.memory_space<vmem>>, vector<1x4x256xf32>
      %111 = vector.shape_cast %110 : vector<1x4x256xf32> to vector<4x256xf32>
      %112 = arith.mulf %111, %109 : vector<4x256xf32>
      %113 = arith.addf %108, %112 : vector<4x256xf32>
      %c18_i32 = arith.constant 18 : i32
      %114 = tpu.dynamic_rotate %37 by %c18_i32 dim 1 : vector<4x256xf32>, i32 -> vector<4x256xf32>
      %c15 = arith.constant 15 : index
      %c0_76 = arith.constant 0 : index
      %c0_77 = arith.constant 0 : index
      %115 = vector.load %arg2[%c15, %c0_76, %c0_77] : memref<49x4x256xf32, #tpu.memory_space<vmem>>, vector<1x4x256xf32>
      %116 = vector.shape_cast %115 : vector<1x4x256xf32> to vector<4x256xf32>
      %117 = arith.mulf %116, %114 : vector<4x256xf32>
      %118 = arith.addf %113, %117 : vector<4x256xf32>
      %c17_i32 = arith.constant 17 : i32
      %119 = tpu.dynamic_rotate %37 by %c17_i32 dim 1 : vector<4x256xf32>, i32 -> vector<4x256xf32>
      %c16 = arith.constant 16 : index
      %c0_78 = arith.constant 0 : index
      %c0_79 = arith.constant 0 : index
      %120 = vector.load %arg2[%c16, %c0_78, %c0_79] : memref<49x4x256xf32, #tpu.memory_space<vmem>>, vector<1x4x256xf32>
      %121 = vector.shape_cast %120 : vector<1x4x256xf32> to vector<4x256xf32>
      %122 = arith.mulf %121, %119 : vector<4x256xf32>
      %123 = arith.addf %118, %122 : vector<4x256xf32>
      %c16_i32 = arith.constant 16 : i32
      %124 = tpu.dynamic_rotate %37 by %c16_i32 dim 1 : vector<4x256xf32>, i32 -> vector<4x256xf32>
      %c17 = arith.constant 17 : index
      %c0_80 = arith.constant 0 : index
      %c0_81 = arith.constant 0 : index
      %125 = vector.load %arg2[%c17, %c0_80, %c0_81] : memref<49x4x256xf32, #tpu.memory_space<vmem>>, vector<1x4x256xf32>
      %126 = vector.shape_cast %125 : vector<1x4x256xf32> to vector<4x256xf32>
      %127 = arith.mulf %126, %124 : vector<4x256xf32>
      %128 = arith.addf %123, %127 : vector<4x256xf32>
      %c15_i32 = arith.constant 15 : i32
      %129 = tpu.dynamic_rotate %37 by %c15_i32 dim 1 : vector<4x256xf32>, i32 -> vector<4x256xf32>
      %c18 = arith.constant 18 : index
      %c0_82 = arith.constant 0 : index
      %c0_83 = arith.constant 0 : index
      %130 = vector.load %arg2[%c18, %c0_82, %c0_83] : memref<49x4x256xf32, #tpu.memory_space<vmem>>, vector<1x4x256xf32>
      %131 = vector.shape_cast %130 : vector<1x4x256xf32> to vector<4x256xf32>
      %132 = arith.mulf %131, %129 : vector<4x256xf32>
      %133 = arith.addf %128, %132 : vector<4x256xf32>
      %c14_i32 = arith.constant 14 : i32
      %134 = tpu.dynamic_rotate %37 by %c14_i32 dim 1 : vector<4x256xf32>, i32 -> vector<4x256xf32>
      %c19 = arith.constant 19 : index
      %c0_84 = arith.constant 0 : index
      %c0_85 = arith.constant 0 : index
      %135 = vector.load %arg2[%c19, %c0_84, %c0_85] : memref<49x4x256xf32, #tpu.memory_space<vmem>>, vector<1x4x256xf32>
      %136 = vector.shape_cast %135 : vector<1x4x256xf32> to vector<4x256xf32>
      %137 = arith.mulf %136, %134 : vector<4x256xf32>
      %138 = arith.addf %133, %137 : vector<4x256xf32>
      %c13_i32 = arith.constant 13 : i32
      %139 = tpu.dynamic_rotate %37 by %c13_i32 dim 1 : vector<4x256xf32>, i32 -> vector<4x256xf32>
      %c20 = arith.constant 20 : index
      %c0_86 = arith.constant 0 : index
      %c0_87 = arith.constant 0 : index
      %140 = vector.load %arg2[%c20, %c0_86, %c0_87] : memref<49x4x256xf32, #tpu.memory_space<vmem>>, vector<1x4x256xf32>
      %141 = vector.shape_cast %140 : vector<1x4x256xf32> to vector<4x256xf32>
      %142 = arith.mulf %141, %139 : vector<4x256xf32>
      %143 = arith.addf %138, %142 : vector<4x256xf32>
      %c3_i32 = arith.constant 3 : i32
      %144 = tpu.dynamic_rotate %37 by %c3_i32 dim 1 : vector<4x256xf32>, i32 -> vector<4x256xf32>
      %c21 = arith.constant 21 : index
      %c0_88 = arith.constant 0 : index
      %c0_89 = arith.constant 0 : index
      %145 = vector.load %arg2[%c21, %c0_88, %c0_89] : memref<49x4x256xf32, #tpu.memory_space<vmem>>, vector<1x4x256xf32>
      %146 = vector.shape_cast %145 : vector<1x4x256xf32> to vector<4x256xf32>
      %147 = arith.mulf %146, %144 : vector<4x256xf32>
      %148 = arith.addf %143, %147 : vector<4x256xf32>
      %c2_i32 = arith.constant 2 : i32
      %149 = tpu.dynamic_rotate %37 by %c2_i32 dim 1 : vector<4x256xf32>, i32 -> vector<4x256xf32>
      %c22 = arith.constant 22 : index
      %c0_90 = arith.constant 0 : index
      %c0_91 = arith.constant 0 : index
      %150 = vector.load %arg2[%c22, %c0_90, %c0_91] : memref<49x4x256xf32, #tpu.memory_space<vmem>>, vector<1x4x256xf32>
      %151 = vector.shape_cast %150 : vector<1x4x256xf32> to vector<4x256xf32>
      %152 = arith.mulf %151, %149 : vector<4x256xf32>
      %153 = arith.addf %148, %152 : vector<4x256xf32>
      %c1_i32 = arith.constant 1 : i32
      %154 = tpu.dynamic_rotate %37 by %c1_i32 dim 1 : vector<4x256xf32>, i32 -> vector<4x256xf32>
      %c23 = arith.constant 23 : index
      %c0_92 = arith.constant 0 : index
      %c0_93 = arith.constant 0 : index
      %155 = vector.load %arg2[%c23, %c0_92, %c0_93] : memref<49x4x256xf32, #tpu.memory_space<vmem>>, vector<1x4x256xf32>
      %156 = vector.shape_cast %155 : vector<1x4x256xf32> to vector<4x256xf32>
      %157 = arith.mulf %156, %154 : vector<4x256xf32>
      %158 = arith.addf %153, %157 : vector<4x256xf32>
      %c0_i32_94 = arith.constant 0 : i32
      %159 = tpu.dynamic_rotate %37 by %c0_i32_94 dim 1 : vector<4x256xf32>, i32 -> vector<4x256xf32>
      %c24 = arith.constant 24 : index
      %c0_95 = arith.constant 0 : index
      %c0_96 = arith.constant 0 : index
      %160 = vector.load %arg2[%c24, %c0_95, %c0_96] : memref<49x4x256xf32, #tpu.memory_space<vmem>>, vector<1x4x256xf32>
      %161 = vector.shape_cast %160 : vector<1x4x256xf32> to vector<4x256xf32>
      %162 = arith.mulf %161, %159 : vector<4x256xf32>
      %163 = arith.addf %158, %162 : vector<4x256xf32>
      %c255_i32 = arith.constant 255 : i32
      %164 = tpu.dynamic_rotate %37 by %c255_i32 dim 1 : vector<4x256xf32>, i32 -> vector<4x256xf32>
      %c25 = arith.constant 25 : index
      %c0_97 = arith.constant 0 : index
      %c0_98 = arith.constant 0 : index
      %165 = vector.load %arg2[%c25, %c0_97, %c0_98] : memref<49x4x256xf32, #tpu.memory_space<vmem>>, vector<1x4x256xf32>
      %166 = vector.shape_cast %165 : vector<1x4x256xf32> to vector<4x256xf32>
      %167 = arith.mulf %166, %164 : vector<4x256xf32>
      %168 = arith.addf %163, %167 : vector<4x256xf32>
      %c254_i32 = arith.constant 254 : i32
      %169 = tpu.dynamic_rotate %37 by %c254_i32 dim 1 : vector<4x256xf32>, i32 -> vector<4x256xf32>
      %c26 = arith.constant 26 : index
      %c0_99 = arith.constant 0 : index
      %c0_100 = arith.constant 0 : index
      %170 = vector.load %arg2[%c26, %c0_99, %c0_100] : memref<49x4x256xf32, #tpu.memory_space<vmem>>, vector<1x4x256xf32>
      %171 = vector.shape_cast %170 : vector<1x4x256xf32> to vector<4x256xf32>
      %172 = arith.mulf %171, %169 : vector<4x256xf32>
      %173 = arith.addf %168, %172 : vector<4x256xf32>
      %c253_i32 = arith.constant 253 : i32
      %174 = tpu.dynamic_rotate %37 by %c253_i32 dim 1 : vector<4x256xf32>, i32 -> vector<4x256xf32>
      %c27 = arith.constant 27 : index
      %c0_101 = arith.constant 0 : index
      %c0_102 = arith.constant 0 : index
      %175 = vector.load %arg2[%c27, %c0_101, %c0_102] : memref<49x4x256xf32, #tpu.memory_space<vmem>>, vector<1x4x256xf32>
      %176 = vector.shape_cast %175 : vector<1x4x256xf32> to vector<4x256xf32>
      %177 = arith.mulf %176, %174 : vector<4x256xf32>
      %178 = arith.addf %173, %177 : vector<4x256xf32>
      %c243_i32 = arith.constant 243 : i32
      %179 = tpu.dynamic_rotate %37 by %c243_i32 dim 1 : vector<4x256xf32>, i32 -> vector<4x256xf32>
      %c28 = arith.constant 28 : index
      %c0_103 = arith.constant 0 : index
      %c0_104 = arith.constant 0 : index
      %180 = vector.load %arg2[%c28, %c0_103, %c0_104] : memref<49x4x256xf32, #tpu.memory_space<vmem>>, vector<1x4x256xf32>
      %181 = vector.shape_cast %180 : vector<1x4x256xf32> to vector<4x256xf32>
      %182 = arith.mulf %181, %179 : vector<4x256xf32>
      %183 = arith.addf %178, %182 : vector<4x256xf32>
      %c242_i32 = arith.constant 242 : i32
      %184 = tpu.dynamic_rotate %37 by %c242_i32 dim 1 : vector<4x256xf32>, i32 -> vector<4x256xf32>
      %c29 = arith.constant 29 : index
      %c0_105 = arith.constant 0 : index
      %c0_106 = arith.constant 0 : index
      %185 = vector.load %arg2[%c29, %c0_105, %c0_106] : memref<49x4x256xf32, #tpu.memory_space<vmem>>, vector<1x4x256xf32>
      %186 = vector.shape_cast %185 : vector<1x4x256xf32> to vector<4x256xf32>
      %187 = arith.mulf %186, %184 : vector<4x256xf32>
      %188 = arith.addf %183, %187 : vector<4x256xf32>
      %c241_i32 = arith.constant 241 : i32
      %189 = tpu.dynamic_rotate %37 by %c241_i32 dim 1 : vector<4x256xf32>, i32 -> vector<4x256xf32>
      %c30 = arith.constant 30 : index
      %c0_107 = arith.constant 0 : index
      %c0_108 = arith.constant 0 : index
      %190 = vector.load %arg2[%c30, %c0_107, %c0_108] : memref<49x4x256xf32, #tpu.memory_space<vmem>>, vector<1x4x256xf32>
      %191 = vector.shape_cast %190 : vector<1x4x256xf32> to vector<4x256xf32>
      %192 = arith.mulf %191, %189 : vector<4x256xf32>
      %193 = arith.addf %188, %192 : vector<4x256xf32>
      %c240_i32 = arith.constant 240 : i32
      %194 = tpu.dynamic_rotate %37 by %c240_i32 dim 1 : vector<4x256xf32>, i32 -> vector<4x256xf32>
      %c31 = arith.constant 31 : index
      %c0_109 = arith.constant 0 : index
      %c0_110 = arith.constant 0 : index
      %195 = vector.load %arg2[%c31, %c0_109, %c0_110] : memref<49x4x256xf32, #tpu.memory_space<vmem>>, vector<1x4x256xf32>
      %196 = vector.shape_cast %195 : vector<1x4x256xf32> to vector<4x256xf32>
      %197 = arith.mulf %196, %194 : vector<4x256xf32>
      %198 = arith.addf %193, %197 : vector<4x256xf32>
      %c239_i32 = arith.constant 239 : i32
      %199 = tpu.dynamic_rotate %37 by %c239_i32 dim 1 : vector<4x256xf32>, i32 -> vector<4x256xf32>
      %c32 = arith.constant 32 : index
      %c0_111 = arith.constant 0 : index
      %c0_112 = arith.constant 0 : index
      %200 = vector.load %arg2[%c32, %c0_111, %c0_112] : memref<49x4x256xf32, #tpu.memory_space<vmem>>, vector<1x4x256xf32>
      %201 = vector.shape_cast %200 : vector<1x4x256xf32> to vector<4x256xf32>
      %202 = arith.mulf %201, %199 : vector<4x256xf32>
      %203 = arith.addf %198, %202 : vector<4x256xf32>
      %c238_i32 = arith.constant 238 : i32
      %204 = tpu.dynamic_rotate %37 by %c238_i32 dim 1 : vector<4x256xf32>, i32 -> vector<4x256xf32>
      %c33 = arith.constant 33 : index
      %c0_113 = arith.constant 0 : index
      %c0_114 = arith.constant 0 : index
      %205 = vector.load %arg2[%c33, %c0_113, %c0_114] : memref<49x4x256xf32, #tpu.memory_space<vmem>>, vector<1x4x256xf32>
      %206 = vector.shape_cast %205 : vector<1x4x256xf32> to vector<4x256xf32>
      %207 = arith.mulf %206, %204 : vector<4x256xf32>
      %208 = arith.addf %203, %207 : vector<4x256xf32>
      %c237_i32 = arith.constant 237 : i32
      %209 = tpu.dynamic_rotate %37 by %c237_i32 dim 1 : vector<4x256xf32>, i32 -> vector<4x256xf32>
      %c34 = arith.constant 34 : index
      %c0_115 = arith.constant 0 : index
      %c0_116 = arith.constant 0 : index
      %210 = vector.load %arg2[%c34, %c0_115, %c0_116] : memref<49x4x256xf32, #tpu.memory_space<vmem>>, vector<1x4x256xf32>
      %211 = vector.shape_cast %210 : vector<1x4x256xf32> to vector<4x256xf32>
      %212 = arith.mulf %211, %209 : vector<4x256xf32>
      %213 = arith.addf %208, %212 : vector<4x256xf32>
      %c227_i32 = arith.constant 227 : i32
      %214 = tpu.dynamic_rotate %37 by %c227_i32 dim 1 : vector<4x256xf32>, i32 -> vector<4x256xf32>
      %c35 = arith.constant 35 : index
      %c0_117 = arith.constant 0 : index
      %c0_118 = arith.constant 0 : index
      %215 = vector.load %arg2[%c35, %c0_117, %c0_118] : memref<49x4x256xf32, #tpu.memory_space<vmem>>, vector<1x4x256xf32>
      %216 = vector.shape_cast %215 : vector<1x4x256xf32> to vector<4x256xf32>
      %217 = arith.mulf %216, %214 : vector<4x256xf32>
      %218 = arith.addf %213, %217 : vector<4x256xf32>
      %c226_i32 = arith.constant 226 : i32
      %219 = tpu.dynamic_rotate %37 by %c226_i32 dim 1 : vector<4x256xf32>, i32 -> vector<4x256xf32>
      %c36 = arith.constant 36 : index
      %c0_119 = arith.constant 0 : index
      %c0_120 = arith.constant 0 : index
      %220 = vector.load %arg2[%c36, %c0_119, %c0_120] : memref<49x4x256xf32, #tpu.memory_space<vmem>>, vector<1x4x256xf32>
      %221 = vector.shape_cast %220 : vector<1x4x256xf32> to vector<4x256xf32>
      %222 = arith.mulf %221, %219 : vector<4x256xf32>
      %223 = arith.addf %218, %222 : vector<4x256xf32>
      %c225_i32 = arith.constant 225 : i32
      %224 = tpu.dynamic_rotate %37 by %c225_i32 dim 1 : vector<4x256xf32>, i32 -> vector<4x256xf32>
      %c37 = arith.constant 37 : index
      %c0_121 = arith.constant 0 : index
      %c0_122 = arith.constant 0 : index
      %225 = vector.load %arg2[%c37, %c0_121, %c0_122] : memref<49x4x256xf32, #tpu.memory_space<vmem>>, vector<1x4x256xf32>
      %226 = vector.shape_cast %225 : vector<1x4x256xf32> to vector<4x256xf32>
      %227 = arith.mulf %226, %224 : vector<4x256xf32>
      %228 = arith.addf %223, %227 : vector<4x256xf32>
      %c224_i32 = arith.constant 224 : i32
      %229 = tpu.dynamic_rotate %37 by %c224_i32 dim 1 : vector<4x256xf32>, i32 -> vector<4x256xf32>
      %c38 = arith.constant 38 : index
      %c0_123 = arith.constant 0 : index
      %c0_124 = arith.constant 0 : index
      %230 = vector.load %arg2[%c38, %c0_123, %c0_124] : memref<49x4x256xf32, #tpu.memory_space<vmem>>, vector<1x4x256xf32>
      %231 = vector.shape_cast %230 : vector<1x4x256xf32> to vector<4x256xf32>
      %232 = arith.mulf %231, %229 : vector<4x256xf32>
      %233 = arith.addf %228, %232 : vector<4x256xf32>
      %c223_i32 = arith.constant 223 : i32
      %234 = tpu.dynamic_rotate %37 by %c223_i32 dim 1 : vector<4x256xf32>, i32 -> vector<4x256xf32>
      %c39 = arith.constant 39 : index
      %c0_125 = arith.constant 0 : index
      %c0_126 = arith.constant 0 : index
      %235 = vector.load %arg2[%c39, %c0_125, %c0_126] : memref<49x4x256xf32, #tpu.memory_space<vmem>>, vector<1x4x256xf32>
      %236 = vector.shape_cast %235 : vector<1x4x256xf32> to vector<4x256xf32>
      %237 = arith.mulf %236, %234 : vector<4x256xf32>
      %238 = arith.addf %233, %237 : vector<4x256xf32>
      %c222_i32 = arith.constant 222 : i32
      %239 = tpu.dynamic_rotate %37 by %c222_i32 dim 1 : vector<4x256xf32>, i32 -> vector<4x256xf32>
      %c40 = arith.constant 40 : index
      %c0_127 = arith.constant 0 : index
      %c0_128 = arith.constant 0 : index
      %240 = vector.load %arg2[%c40, %c0_127, %c0_128] : memref<49x4x256xf32, #tpu.memory_space<vmem>>, vector<1x4x256xf32>
      %241 = vector.shape_cast %240 : vector<1x4x256xf32> to vector<4x256xf32>
      %242 = arith.mulf %241, %239 : vector<4x256xf32>
      %243 = arith.addf %238, %242 : vector<4x256xf32>
      %c221_i32 = arith.constant 221 : i32
      %244 = tpu.dynamic_rotate %37 by %c221_i32 dim 1 : vector<4x256xf32>, i32 -> vector<4x256xf32>
      %c41 = arith.constant 41 : index
      %c0_129 = arith.constant 0 : index
      %c0_130 = arith.constant 0 : index
      %245 = vector.load %arg2[%c41, %c0_129, %c0_130] : memref<49x4x256xf32, #tpu.memory_space<vmem>>, vector<1x4x256xf32>
      %246 = vector.shape_cast %245 : vector<1x4x256xf32> to vector<4x256xf32>
      %247 = arith.mulf %246, %244 : vector<4x256xf32>
      %248 = arith.addf %243, %247 : vector<4x256xf32>
      %c211_i32 = arith.constant 211 : i32
      %249 = tpu.dynamic_rotate %37 by %c211_i32 dim 1 : vector<4x256xf32>, i32 -> vector<4x256xf32>
      %c42 = arith.constant 42 : index
      %c0_131 = arith.constant 0 : index
      %c0_132 = arith.constant 0 : index
      %250 = vector.load %arg2[%c42, %c0_131, %c0_132] : memref<49x4x256xf32, #tpu.memory_space<vmem>>, vector<1x4x256xf32>
      %251 = vector.shape_cast %250 : vector<1x4x256xf32> to vector<4x256xf32>
      %252 = arith.mulf %251, %249 : vector<4x256xf32>
      %253 = arith.addf %248, %252 : vector<4x256xf32>
      %c210_i32 = arith.constant 210 : i32
      %254 = tpu.dynamic_rotate %37 by %c210_i32 dim 1 : vector<4x256xf32>, i32 -> vector<4x256xf32>
      %c43 = arith.constant 43 : index
      %c0_133 = arith.constant 0 : index
      %c0_134 = arith.constant 0 : index
      %255 = vector.load %arg2[%c43, %c0_133, %c0_134] : memref<49x4x256xf32, #tpu.memory_space<vmem>>, vector<1x4x256xf32>
      %256 = vector.shape_cast %255 : vector<1x4x256xf32> to vector<4x256xf32>
      %257 = arith.mulf %256, %254 : vector<4x256xf32>
      %258 = arith.addf %253, %257 : vector<4x256xf32>
      %c209_i32 = arith.constant 209 : i32
      %259 = tpu.dynamic_rotate %37 by %c209_i32 dim 1 : vector<4x256xf32>, i32 -> vector<4x256xf32>
      %c44 = arith.constant 44 : index
      %c0_135 = arith.constant 0 : index
      %c0_136 = arith.constant 0 : index
      %260 = vector.load %arg2[%c44, %c0_135, %c0_136] : memref<49x4x256xf32, #tpu.memory_space<vmem>>, vector<1x4x256xf32>
      %261 = vector.shape_cast %260 : vector<1x4x256xf32> to vector<4x256xf32>
      %262 = arith.mulf %261, %259 : vector<4x256xf32>
      %263 = arith.addf %258, %262 : vector<4x256xf32>
      %c208_i32 = arith.constant 208 : i32
      %264 = tpu.dynamic_rotate %37 by %c208_i32 dim 1 : vector<4x256xf32>, i32 -> vector<4x256xf32>
      %c45 = arith.constant 45 : index
      %c0_137 = arith.constant 0 : index
      %c0_138 = arith.constant 0 : index
      %265 = vector.load %arg2[%c45, %c0_137, %c0_138] : memref<49x4x256xf32, #tpu.memory_space<vmem>>, vector<1x4x256xf32>
      %266 = vector.shape_cast %265 : vector<1x4x256xf32> to vector<4x256xf32>
      %267 = arith.mulf %266, %264 : vector<4x256xf32>
      %268 = arith.addf %263, %267 : vector<4x256xf32>
      %c207_i32 = arith.constant 207 : i32
      %269 = tpu.dynamic_rotate %37 by %c207_i32 dim 1 : vector<4x256xf32>, i32 -> vector<4x256xf32>
      %c46 = arith.constant 46 : index
      %c0_139 = arith.constant 0 : index
      %c0_140 = arith.constant 0 : index
      %270 = vector.load %arg2[%c46, %c0_139, %c0_140] : memref<49x4x256xf32, #tpu.memory_space<vmem>>, vector<1x4x256xf32>
      %271 = vector.shape_cast %270 : vector<1x4x256xf32> to vector<4x256xf32>
      %272 = arith.mulf %271, %269 : vector<4x256xf32>
      %273 = arith.addf %268, %272 : vector<4x256xf32>
      %c206_i32 = arith.constant 206 : i32
      %274 = tpu.dynamic_rotate %37 by %c206_i32 dim 1 : vector<4x256xf32>, i32 -> vector<4x256xf32>
      %c47 = arith.constant 47 : index
      %c0_141 = arith.constant 0 : index
      %c0_142 = arith.constant 0 : index
      %275 = vector.load %arg2[%c47, %c0_141, %c0_142] : memref<49x4x256xf32, #tpu.memory_space<vmem>>, vector<1x4x256xf32>
      %276 = vector.shape_cast %275 : vector<1x4x256xf32> to vector<4x256xf32>
      %277 = arith.mulf %276, %274 : vector<4x256xf32>
      %278 = arith.addf %273, %277 : vector<4x256xf32>
      %c205_i32 = arith.constant 205 : i32
      %279 = tpu.dynamic_rotate %37 by %c205_i32 dim 1 : vector<4x256xf32>, i32 -> vector<4x256xf32>
      %c48 = arith.constant 48 : index
      %c0_143 = arith.constant 0 : index
      %c0_144 = arith.constant 0 : index
      %280 = vector.load %arg2[%c48, %c0_143, %c0_144] : memref<49x4x256xf32, #tpu.memory_space<vmem>>, vector<1x4x256xf32>
      %281 = vector.shape_cast %280 : vector<1x4x256xf32> to vector<4x256xf32>
      %282 = arith.mulf %281, %279 : vector<4x256xf32>
      %283 = arith.addf %278, %282 : vector<4x256xf32>
      %284 = vector.extract_strided_slice %283 {offsets = [0, 0], sizes = [1, 256], strides = [1, 1]} : vector<4x256xf32> to vector<1x256xf32>
      %285 = vector.extract_strided_slice %283 {offsets = [1, 0], sizes = [1, 256], strides = [1, 1]} : vector<4x256xf32> to vector<1x256xf32>
      %286 = arith.addf %284, %285 : vector<1x256xf32>
      %cst_145 = arith.constant 5.000000e-01 : f32
      %287 = vector.broadcast %cst_145 : f32 to vector<1x256xf32>
      %288 = arith.mulf %287, %286 : vector<1x256xf32>
      %289 = math.tanh %288 : vector<1x256xf32>
      %cst_146 = arith.constant 5.000000e-01 : f32
      %290 = vector.broadcast %cst_146 : f32 to vector<1x256xf32>
      %291 = arith.mulf %290, %289 : vector<1x256xf32>
      %cst_147 = arith.constant 5.000000e-01 : f32
      %292 = vector.broadcast %cst_147 : f32 to vector<1x256xf32>
      %293 = arith.addf %292, %291 : vector<1x256xf32>
      %c0_148 = arith.constant 0 : index
      %c0_149 = arith.constant 0 : index
      %c0_150 = arith.constant 0 : index
      %294 = vector.load %arg4[%c0_148, %c0_149, %c0_150] : memref<2x1x256xf32, #tpu.memory_space<vmem>>, vector<1x1x256xf32>
      %295 = vector.shape_cast %294 : vector<1x1x256xf32> to vector<1x256xf32>
      %296 = vector.shape_cast %293 : vector<1x256xf32> to vector<1x1x256xf32>
      tpu.vector_store %arg4[%c0_148, %c0_149, %c0_150], %296 {strides = array<i32>} : memref<2x1x256xf32, #tpu.memory_space<vmem>>, vector<1x1x256xf32>,
      %297 = vector.extract_strided_slice %283 {offsets = [2, 0], sizes = [1, 256], strides = [1, 1]} : vector<4x256xf32> to vector<1x256xf32>
      %298 = vector.extract_strided_slice %283 {offsets = [3, 0], sizes = [1, 256], strides = [1, 1]} : vector<4x256xf32> to vector<1x256xf32>
      %299 = arith.addf %297, %298 : vector<1x256xf32>
      %cst_151 = arith.constant 5.000000e-01 : f32
      %300 = vector.broadcast %cst_151 : f32 to vector<1x256xf32>
      %301 = arith.mulf %300, %299 : vector<1x256xf32>
      %302 = math.tanh %301 : vector<1x256xf32>
      %cst_152 = arith.constant 5.000000e-01 : f32
      %303 = vector.broadcast %cst_152 : f32 to vector<1x256xf32>
      %304 = arith.mulf %303, %302 : vector<1x256xf32>
      %cst_153 = arith.constant 5.000000e-01 : f32
      %305 = vector.broadcast %cst_153 : f32 to vector<1x256xf32>
      %306 = arith.addf %305, %304 : vector<1x256xf32>
      %c1_154 = arith.constant 1 : index
      %c0_155 = arith.constant 0 : index
      %c0_156 = arith.constant 0 : index
      %307 = vector.load %arg4[%c1_154, %c0_155, %c0_156] : memref<2x1x256xf32, #tpu.memory_space<vmem>>, vector<1x1x256xf32>
      %308 = vector.shape_cast %307 : vector<1x1x256xf32> to vector<1x256xf32>
      %309 = vector.shape_cast %306 : vector<1x256xf32> to vector<1x1x256xf32>
      tpu.vector_store %arg4[%c1_154, %c0_155, %c0_156], %309 {strides = array<i32>} : memref<2x1x256xf32, #tpu.memory_space<vmem>>, vector<1x1x256xf32>,
    } else {
    }
    return
  }
  func.func @transform_0(%arg0: i32, %arg1: i32) -> (i32, i32, i32) {
    %c0_i32 = arith.constant 0 : i32
    %c0_i32_0 = arith.constant 0 : i32
    %c0_i32_1 = arith.constant 0 : i32
    %c0_i32_2 = arith.constant 0 : i32
    return %c0_i32, %c0_i32_0, %c0_i32_1 : i32, i32, i32
  }
  func.func @transform_1(%arg0: i32, %arg1: i32) -> (i32, i32, i32) {
    %c0_i32 = arith.constant 0 : i32
    %c0_i32_0 = arith.constant 0 : i32
    return %arg0, %arg1, %c0_i32 : i32, i32, i32
  }
  func.func @transform_2(%arg0: i32, %arg1: i32) -> (i32, i32, i32) {
    %c0_i32 = arith.constant 0 : i32
    %c0_i32_0 = arith.constant 0 : i32
    %c0_i32_1 = arith.constant 0 : i32
    return %arg0, %c0_i32, %c0_i32_0 : i32, i32, i32
  }
}

</mosaic_0001>

<llo_original>
// kernel: tpu_custom_call.1
$region0: #{tpu_custom_call.1}
  #allocation0 [shape = 'u32[]', space=smem, size = 0x4, offset = 0x4, fixed_abs, tag = 'smem constant byte address 0x4 - core index']
  #allocation1 [shape = 'u32[72,128]{1,0:T(1,128)}', space=vmem, size = 0x9000, scoped, tag = 'internal scratch']
  #allocation2 [shape = 'f32[2,4,256]{2,1,0:T(4,128)}', space=vmem, size = 0x2000, scoped, tag = 'scratch operand']
  #allocation3 [shape = 'f32[2,4,256]{2,1,0:T(4,128)}', space=vmem, size = 0x2000, scoped, tag = 'scratch operand']
  #allocation4 [shape = 'f32[4,256]{1,0:T(4,128)}', space=vmem, size = 0x1000, scoped, tag = 'scratch operand']
  %s0 = inlined_call_operand.hbm [shape: f32[49,4,256], index: 0, kind: input, shape index: {}]
  %s1 = inlined_call_operand.hbm [shape: f32[2,4,256], index: 1, kind: input, shape index: {}]
  %s2 = inlined_call_operand.hbm [shape: f32[2,1,256], index: 2, kind: output, shape index: {}]
  %s3 = sld [smem:[#allocation0]]
  $region34: #{tpu_custom_call.1} parent=0
    _
  %s5 = ssub.s32 1, %s3
  %s6 = scalar_select 0, %s5, %s3
  $region1: #{tpu_custom_call.1} parent=0
    #allocation5 [shape = 'u8[200704]{0}', space=vmem, size = 0x31000, scoped, tag = 'input window, operand 0, single buffered']
    #allocation6 [shape = 's32[1]{0}', space=sflag, size = 0x4, scoped, tag = 'scoped memory for tpu_custom_call.1']
    #allocation7 [shape = 's32[1]{0}', space=sflag, size = 0x4, scoped, tag = 'scoped memory for tpu_custom_call.1']
    #allocation8 [shape = 'u8[8192]{0}', space=vmem, size = 0x2000, scoped, tag = 'input window, operand 1, single buffered']
    #allocation9 [shape = 's32[1]{0}', space=sflag, size = 0x4, scoped, tag = 'scoped memory for tpu_custom_call.1']
    #allocation10 [shape = 'u8[2048]{0}', space=vmem, size = 0x800, scoped, tag = 'output window, operand 0, single buffered']
    %7 = vsyncpa [#allocation6], 0
    %8 = vsyncpa [#allocation9], 0
    %9 = vsyncpa [#allocation7], 0
    // Predicated region
    $region2: #{tpu_custom_call.1} parent=1 // pred_check
      _
    $region3: #{tpu_custom_call.1} parent=1 // pred_check_branch
      %11 = sbr.rel (0) target = $region5
    $region4: #{tpu_custom_call.1} parent=1 // pred_region
      %13 = vsyncadd [#allocation6], 0
      %s14 = sshll.u32 %s0, 4
      %s15 = int_to_ptr.hbm [resolvable:$true] %s14
      %s16 = sshll.u32 [#allocation5], 4
      %s17 = int_to_ptr.vmem [resolvable:$true] %s16
      %22 = dma.hbm_to_vmem [thread:$0]  %s15, 6272, %s17, [#allocation6], 128, 128, 8
    $region5: #{tpu_custom_call.1} parent=1 // pred_fallthru
      _
    // Predicated region
    $region6: #{tpu_custom_call.1} parent=1 // pred_check
      _
    $region7: #{tpu_custom_call.1} parent=1 // pred_check_branch
      %24 = sbr.rel (0) target = $region9
    $region8: #{tpu_custom_call.1} parent=1 // pred_region
      %26 = vsyncadd [#allocation9], 0
      %s27 = sshll.u32 %s1, 4
      %s28 = int_to_ptr.hbm [resolvable:$true] %s27
      %s29 = sshll.u32 [#allocation8], 4
      %s30 = int_to_ptr.vmem [resolvable:$true] %s29
      %35 = dma.hbm_to_vmem [thread:$0]  %s28, 256, %s30, [#allocation9], 128, 128, 8
    $region9: #{tpu_custom_call.1} parent=1 // pred_fallthru
      _
    // Predicated region
    $region10: #{tpu_custom_call.1} parent=1 // pred_check
      _
    $region11: #{tpu_custom_call.1} parent=1 // pred_check_branch
      %37 = sbr.rel (0) target = $region13
    $region12: #{tpu_custom_call.1} parent=1 // pred_region
      %39 = dma.done [#allocation6], 6272
    $region13: #{tpu_custom_call.1} parent=1 // pred_fallthru
      _
    // Predicated region
    $region14: #{tpu_custom_call.1} parent=1 // pred_check
      _
    $region15: #{tpu_custom_call.1} parent=1 // pred_check_branch
      %41 = sbr.rel (0) target = $region17
    $region16: #{tpu_custom_call.1} parent=1 // pred_region
      %43 = dma.done [#allocation9], 256
    $region17: #{tpu_custom_call.1} parent=1 // pred_fallthru
      _
    %p44 = scmp.eq.s32.totalorder 0, 0
    // Predicated region
    $region18: #{tpu_custom_call.1} parent=1 // pred_check
      %p45 = pneg %p44
    $region19: #{tpu_custom_call.1} parent=1 // pred_check_branch
      %47 = sbr.rel (%p45) target = $region21
    $region20: #{tpu_custom_call.1} parent=1 // pred_region
      %48 = vst [vmem:[#allocation2] sm:$0xff] 0.0
      %49 = vst [vmem:[#allocation2 + $0x8] sm:$0xff] 0.0
      %50 = vst [vmem:[#allocation3] sm:$0xff] -inf
      %51 = vst [vmem:[#allocation3 + $0x8] sm:$0xff] -inf
    $region21: #{tpu_custom_call.1} parent=1 // pred_fallthru
      _
    %v52 = vld [vmem:[#allocation2] sm:$0xff]
    %v53 = vld [vmem:[#allocation2 + $0x8] sm:$0xff]
    %v54 = vld [vmem:[#allocation3] sm:$0xff]
    %v55 = vld [vmem:[#allocation3 + $0x8] sm:$0xff]
    %v56 = vld [vmem:[#allocation8] sm:$0xff]
    %v57 = vld [vmem:[#allocation8 + $0x8] sm:$0xff]
    %v58 = vadd.f32 %v52, %v56
    %v59 = vadd.f32 %v53, %v57
    %v60 = vmax.f32 %v54, %v56
    %v61 = vmax.f32 %v55, %v57
    %62 = vst [vmem:[#allocation2] sm:$0xff] %v58
    %63 = vst [vmem:[#allocation2 + $0x8] sm:$0xff] %v59
    %64 = vst [vmem:[#allocation3] sm:$0xff] %v60
    %65 = vst [vmem:[#allocation3 + $0x8] sm:$0xff] %v61
    // Predicated region
    $region22: #{tpu_custom_call.1} parent=1 // pred_check
      %p66 = pneg %p44
    $region23: #{tpu_custom_call.1} parent=1 // pred_check_branch
      %68 = sbr.rel (%p66) target = $region25
    $region24: #{tpu_custom_call.1} parent=1 // pred_region
      %v69 = vld [vmem:[#allocation2] sm:$0xff]
      %71 = vst [vmem:[#allocation1] ss:$2 sm:$0xff] %v69
      %v72 = vld.sshfl [vmem:[#allocation1] sm:$0xff pattern:$0x75316420]
      %v73 = vld.sshfl [vmem:[#allocation1 + $0x8] sm:$0xff pattern:$0x75316420]
      %vm76 = vcmask 1043456
      %v77 = vsel %vm76, %v72, 0.0
      %v78 = vrot.slane %v77, 4
      %v79 = vadd.f32 %v77, %v78
      %v80 = vrot.slane %v79, 2
      %v81 = vadd.f32 %v79, %v80
      %v82 = vrot.slane %v81, 1
      %v83 = vadd.f32 %v81, %v82
      %v84 = vsel %vm76, %v73, 0.0
      %v85 = vrot.slane %v84, 4
      %v86 = vadd.f32 %v84, %v85
      %v87 = vrot.slane %v86, 2
      %v88 = vadd.f32 %v86, %v87
      %v89 = vrot.slane %v88, 1
      %v90 = vadd.f32 %v88, %v89
      %v91 = vmul.f32 %v83, 0.25
      %v92 = vmul.f32 %v90, 0.25
      %v95 = vrot.slane %v92, 7
      %vm96 = vcmask 1040384
      %v97 = vsel %vm96, %v91, %v95
      %v99 = vlaneseq
      %vm100 = vcmp.ge.s32.totalorder %v99, 0
      %vm101 = vcmp.lt.s32.totalorder %v99, 256
      %vm102 = vmand %vm100, %vm101
      %103 = vst.msk [vmem:[#allocation4] ss:$4 sm:$0x3] %vm102, %v97
      %v104 = vld [vmem:[#allocation3] sm:$0xff]
      %106 = vst [vmem:[#allocation1] ss:$2 sm:$0xff] %v104
      %v107 = vld.sshfl [vmem:[#allocation1] sm:$0xff pattern:$0x75316420]
      %v108 = vld.sshfl [vmem:[#allocation1 + $0x8] sm:$0xff pattern:$0x75316420]
      %v111 = vsel %vm76, %v107, -inf
      %v112 = vrot.slane %v111, 4
      %v113 = vmax.f32 %v111, %v112
      %v114 = vrot.slane %v113, 2
      %v115 = vmax.f32 %v113, %v114
      %v116 = vrot.slane %v115, 1
      %v117 = vmax.f32 %v115, %v116
      %v118 = vsel %vm76, %v108, -inf
      %v119 = vrot.slane %v118, 4
      %v120 = vmax.f32 %v118, %v119
      %v121 = vrot.slane %v120, 2
      %v122 = vmax.f32 %v120, %v121
      %v123 = vrot.slane %v122, 1
      %v124 = vmax.f32 %v122, %v123
      %v127 = vrot.slane %v124, 7
      %v128 = vsel %vm96, %v117, %v127
      %s130 = scalar_lea.vmem [#allocation4], 1
      %131 = vst.msk [vmem:[%s130] ss:$4 sm:$0x3] %vm102, %v128
      %s132 = scalar_lea.vmem [#allocation2], 8
      %v133 = vld [vmem:[%s132] sm:$0xff]
      %135 = vst [vmem:[#allocation1] ss:$2 sm:$0xff] %v133
      %v136 = vld.sshfl [vmem:[#allocation1] sm:$0xff pattern:$0x75316420]
      %v137 = vld.sshfl [vmem:[#allocation1 + $0x8] sm:$0xff pattern:$0x75316420]
      %v140 = vsel %vm76, %v136, 0.0
      %v141 = vrot.slane %v140, 4
      %v142 = vadd.f32 %v140, %v141
      %v143 = vrot.slane %v142, 2
      %v144 = vadd.f32 %v142, %v143
      %v145 = vrot.slane %v144, 1
      %v146 = vadd.f32 %v144, %v145
      %v147 = vsel %vm76, %v137, 0.0
      %v148 = vrot.slane %v147, 4
      %v149 = vadd.f32 %v147, %v148
      %v150 = vrot.slane %v149, 2
      %v151 = vadd.f32 %v149, %v150
      %v152 = vrot.slane %v151, 1
      %v153 = vadd.f32 %v151, %v152
      %v154 = vmul.f32 %v146, 0.25
      %v155 = vmul.f32 %v153, 0.25
      %v158 = vrot.slane %v155, 7
      %v159 = vsel %vm96, %v154, %v158
      %s161 = scalar_lea.vmem [#allocation4], 2
      %162 = vst.msk [vmem:[%s161] ss:$4 sm:$0x3] %vm102, %v159
      %s163 = scalar_lea.vmem [#allocation3], 8
      %v164 = vld [vmem:[%s163] sm:$0xff]
      %166 = vst [vmem:[#allocation1] ss:$2 sm:$0xff] %v164
      %v167 = vld.sshfl [vmem:[#allocation1] sm:$0xff pattern:$0x75316420]
      %v168 = vld.sshfl [vmem:[#allocation1 + $0x8] sm:$0xff pattern:$0x75316420]
      %v171 = vsel %vm76, %v167, -inf
      %v172 = vrot.slane %v171, 4
      %v173 = vmax.f32 %v171, %v172
      %v174 = vrot.slane %v173, 2
      %v175 = vmax.f32 %v173, %v174
      %v176 = vrot.slane %v175, 1
      %v177 = vmax.f32 %v175, %v176
      %v178 = vsel %vm76, %v168, -inf
      %v179 = vrot.slane %v178, 4
      %v180 = vmax.f32 %v178, %v179
      %v181 = vrot.slane %v180, 2
      %v182 = vmax.f32 %v180, %v181
      %v183 = vrot.slane %v182, 1
      %v184 = vmax.f32 %v182, %v183
      %v187 = vrot.slane %v184, 7
      %v188 = vsel %vm96, %v177, %v187
      %s190 = scalar_lea.vmem [#allocation4], 3
      %191 = vst.msk [vmem:[%s190] ss:$4 sm:$0x3] %vm102, %v188
      %v192 = vld [vmem:[#allocation4] sm:$0xff]
      %194 = vst [vmem:[#allocation1] ss:$2 sm:$0xff] %v192
      %v195 = vld.sshfl [vmem:[#allocation1] sm:$0xff pattern:$0x75316420]
      %v196 = vld.sshfl [vmem:[#allocation1 + $0x8] sm:$0xff pattern:$0x75316420]
      %199 = vrot.lane.b32.xlu0 %v195, 51
      %v200 = vpop.permute.xlu0 %199
      %201 = vrot.lane.b32.xlu0 %v196, 51
      %v202 = vpop.permute.xlu0 %201
      %v203 = vlaneseq
      %v204 = vand.u32 %v203, 127
      %vm205 = vcmp.lt.s32.totalorder %v204, 51
      %v206 = vsel %vm205, %v200, %v202
      %v207 = vsel %vm205, %v202, %v200
      %v208 = vld [vmem:[#allocation5] sm:$0xff]
      %v211 = vrot.slane %v206, 4
      %v212 = vsel %vm76, %v207, %v211
      %v214 = vmul.f32 %v208, %v212
      %v215 = vadd.f32 %v214, 0.0
      %216 = vst [vmem:[#allocation1] ss:$2 sm:$0xff] %v192
      %v217 = vld.sshfl [vmem:[#allocation1] sm:$0xff pattern:$0x75316420]
      %v218 = vld.sshfl [vmem:[#allocation1 + $0x8] sm:$0xff pattern:$0x75316420]
      %221 = vrot.lane.b32.xlu0 %v217, 50
      %v222 = vpop.permute.xlu0 %221
      %223 = vrot.lane.b32.xlu0 %v218, 50
      %v224 = vpop.permute.xlu0 %223
      %vm225 = vcmp.lt.s32.totalorder %v204, 50
      %v226 = vsel %vm225, %v222, %v224
      %v227 = vsel %vm225, %v224, %v222
      %s228 = scalar_lea.vmem [#allocation5], 8
      %v229 = vld [vmem:[%s228] sm:$0xff]
      %v232 = vrot.slane %v226, 4
      %v233 = vsel %vm76, %v227, %v232
      %v235 = vmul.f32 %v229, %v233
      %v236 = vadd.f32 %v215, %v235
      %237 = vst [vmem:[#allocation1] ss:$2 sm:$0xff] %v192
      %v238 = vld.sshfl [vmem:[#allocation1] sm:$0xff pattern:$0x75316420]
      %v239 = vld.sshfl [vmem:[#allocation1 + $0x8] sm:$0xff pattern:$0x75316420]
      %242 = vrot.lane.b32.xlu0 %v238, 49
      %v243 = vpop.permute.xlu0 %242
      %244 = vrot.lane.b32.xlu0 %v239, 49
      %v245 = vpop.permute.xlu0 %244
      %vm246 = vcmp.lt.s32.totalorder %v204, 49
      %v247 = vsel %vm246, %v243, %v245
      %v248 = vsel %vm246, %v245, %v243
      %s249 = scalar_lea.vmem [#allocation5], 16
      %v250 = vld [vmem:[%s249] sm:$0xff]
      %v253 = vrot.slane %v247, 4
      %v254 = vsel %vm76, %v248, %v253
      %v256 = vmul.f32 %v250, %v254
      %v257 = vadd.f32 %v236, %v256
      %258 = vst [vmem:[#allocation1] ss:$2 sm:$0xff] %v192
      %v259 = vld.sshfl [vmem:[#allocation1] sm:$0xff pattern:$0x75316420]
      %v260 = vld.sshfl [vmem:[#allocation1 + $0x8] sm:$0xff pattern:$0x75316420]
      %263 = vrot.lane.b32.xlu0 %v259, 48
      %v264 = vpop.permute.xlu0 %263
      %265 = vrot.lane.b32.xlu0 %v260, 48
      %v266 = vpop.permute.xlu0 %265
      %vm267 = vcmp.lt.s32.totalorder %v204, 48
      %v268 = vsel %vm267, %v264, %v266
      %v269 = vsel %vm267, %v266, %v264
      %s270 = scalar_lea.vmem [#allocation5], 24
      %v271 = vld [vmem:[%s270] sm:$0xff]
      %v274 = vrot.slane %v268, 4
      %v275 = vsel %vm76, %v269, %v274
      %v277 = vmul.f32 %v271, %v275
      %v278 = vadd.f32 %v257, %v277
      %279 = vst [vmem:[#allocation1] ss:$2 sm:$0xff] %v192
      %v280 = vld.sshfl [vmem:[#allocation1] sm:$0xff pattern:$0x75316420]
      %v281 = vld.sshfl [vmem:[#allocation1 + $0x8] sm:$0xff pattern:$0x75316420]
      %284 = vrot.lane.b32.xlu0 %v280, 47
      %v285 = vpop.permute.xlu0 %284
      %286 = vrot.lane.b32.xlu0 %v281, 47
      %v287 = vpop.permute.xlu0 %286
      %vm288 = vcmp.lt.s32.totalorder %v204, 47
      %v289 = vsel %vm288, %v285, %v287
      %v290 = vsel %vm288, %v287, %v285
      %s291 = scalar_lea.vmem [#allocation5], 32
      %v292 = vld [vmem:[%s291] sm:$0xff]
      %v295 = vrot.slane %v289, 4
      %v296 = vsel %vm76, %v290, %v295
      %v298 = vmul.f32 %v292, %v296
      %v299 = vadd.f32 %v278, %v298
      %300 = vst [vmem:[#allocation1] ss:$2 sm:$0xff] %v192
      %v301 = vld.sshfl [vmem:[#allocation1] sm:$0xff pattern:$0x75316420]
      %v302 = vld.sshfl [vmem:[#allocation1 + $0x8] sm:$0xff pattern:$0x75316420]
      %305 = vrot.lane.b32.xlu0 %v301, 46
      %v306 = vpop.permute.xlu0 %305
      %307 = vrot.lane.b32.xlu0 %v302, 46
      %v308 = vpop.permute.xlu0 %307
      %vm309 = vcmp.lt.s32.totalorder %v204, 46
      %v310 = vsel %vm309, %v306, %v308
      %v311 = vsel %vm309, %v308, %v306
      %s312 = scalar_lea.vmem [#allocation5], 40
      %v313 = vld [vmem:[%s312] sm:$0xff]
      %v316 = vrot.slane %v310, 4
      %v317 = vsel %vm76, %v311, %v316
      %v319 = vmul.f32 %v313, %v317
      %v320 = vadd.f32 %v299, %v319
      %321 = vst [vmem:[#allocation1] ss:$2 sm:$0xff] %v192
      %v322 = vld.sshfl [vmem:[#allocation1] sm:$0xff pattern:$0x75316420]
      %v323 = vld.sshfl [vmem:[#allocation1 + $0x8] sm:$0xff pattern:$0x75316420]
      %326 = vrot.lane.b32.xlu0 %v322, 45
      %v327 = vpop.permute.xlu0 %326
      %328 = vrot.lane.b32.xlu0 %v323, 45
      %v329 = vpop.permute.xlu0 %328
      %vm330 = vcmp.lt.s32.totalorder %v204, 45
      %v331 = vsel %vm330, %v327, %v329
      %v332 = vsel %vm330, %v329, %v327
      %s333 = scalar_lea.vmem [#allocation5], 48
      %v334 = vld [vmem:[%s333] sm:$0xff]
      %v337 = vrot.slane %v331, 4
      %v338 = vsel %vm76, %v332, %v337
      %v340 = vmul.f32 %v334, %v338
      %v341 = vadd.f32 %v320, %v340
      %342 = vst [vmem:[#allocation1] ss:$2 sm:$0xff] %v192
      %v343 = vld.sshfl [vmem:[#allocation1] sm:$0xff pattern:$0x75316420]
      %v344 = vld.sshfl [vmem:[#allocation1 + $0x8] sm:$0xff pattern:$0x75316420]
      %347 = vrot.lane.b32.xlu0 %v343, 35
      %v348 = vpop.permute.xlu0 %347
      %349 = vrot.lane.b32.xlu0 %v344, 35
      %v350 = vpop.permute.xlu0 %349
      %vm351 = vcmp.lt.s32.totalorder %v204, 35
      %v352 = vsel %vm351, %v348, %v350
      %v353 = vsel %vm351, %v350, %v348
      %s354 = scalar_lea.vmem [#allocation5], 56
      %v355 = vld [vmem:[%s354] sm:$0xff]
      %v358 = vrot.slane %v352, 4
      %v359 = vsel %vm76, %v353, %v358
      %v361 = vmul.f32 %v355, %v359
      %v362 = vadd.f32 %v341, %v361
      %363 = vst [vmem:[#allocation1] ss:$2 sm:$0xff] %v192
      %v364 = vld.sshfl [vmem:[#allocation1] sm:$0xff pattern:$0x75316420]
      %v365 = vld.sshfl [vmem:[#allocation1 + $0x8] sm:$0xff pattern:$0x75316420]
      %368 = vrot.lane.b32.xlu0 %v364, 34
      %v369 = vpop.permute.xlu0 %368
      %370 = vrot.lane.b32.xlu0 %v365, 34
      %v371 = vpop.permute.xlu0 %370
      %vm372 = vcmp.lt.s32.totalorder %v204, 34
      %v373 = vsel %vm372, %v369, %v371
      %v374 = vsel %vm372, %v371, %v369
      %s375 = scalar_lea.vmem [#allocation5], 64
      %v376 = vld [vmem:[%s375] sm:$0xff]
      %v379 = vrot.slane %v373, 4
      %v380 = vsel %vm76, %v374, %v379
      %v382 = vmul.f32 %v376, %v380
      %v383 = vadd.f32 %v362, %v382
      %384 = vst [vmem:[#allocation1] ss:$2 sm:$0xff] %v192
      %v385 = vld.sshfl [vmem:[#allocation1] sm:$0xff pattern:$0x75316420]
      %v386 = vld.sshfl [vmem:[#allocation1 + $0x8] sm:$0xff pattern:$0x75316420]
      %389 = vrot.lane.b32.xlu0 %v385, 33
      %v390 = vpop.permute.xlu0 %389
      %391 = vrot.lane.b32.xlu0 %v386, 33
      %v392 = vpop.permute.xlu0 %391
      %vm393 = vcmp.lt.s32.totalorder %v204, 33
      %v394 = vsel %vm393, %v390, %v392
      %v395 = vsel %vm393, %v392, %v390
      %s396 = scalar_lea.vmem [#allocation5], 72
      %v397 = vld [vmem:[%s396] sm:$0xff]
      %v400 = vrot.slane %v394, 4
      %v401 = vsel %vm76, %v395, %v400
      %v403 = vmul.f32 %v397, %v401
      %v404 = vadd.f32 %v383, %v403
      %405 = vst [vmem:[#allocation1] ss:$2 sm:$0xff] %v192
      %v406 = vld.sshfl [vmem:[#allocation1] sm:$0xff pattern:$0x75316420]
      %v407 = vld.sshfl [vmem:[#allocation1 + $0x8] sm:$0xff pattern:$0x75316420]
      %410 = vrot.lane.b32.xlu0 %v406, 32
      %v411 = vpop.permute.xlu0 %410
      %412 = vrot.lane.b32.xlu0 %v407, 32
      %v413 = vpop.permute.xlu0 %412
      %vm414 = vcmp.lt.s32.totalorder %v204, 32
      %v415 = vsel %vm414, %v411, %v413
      %v416 = vsel %vm414, %v413, %v411
      %s417 = scalar_lea.vmem [#allocation5], 80
      %v418 = vld [vmem:[%s417] sm:$0xff]
      %v421 = vrot.slane %v415, 4
      %v422 = vsel %vm76, %v416, %v421
      %v424 = vmul.f32 %v418, %v422
      %v425 = vadd.f32 %v404, %v424
      %426 = vst [vmem:[#allocation1] ss:$2 sm:$0xff] %v192
      %v427 = vld.sshfl [vmem:[#allocation1] sm:$0xff pattern:$0x75316420]
      %v428 = vld.sshfl [vmem:[#allocation1 + $0x8] sm:$0xff pattern:$0x75316420]
      %431 = vrot.lane.b32.xlu0 %v427, 31
      %v432 = vpop.permute.xlu0 %431
      %433 = vrot.lane.b32.xlu0 %v428, 31
      %v434 = vpop.permute.xlu0 %433
      %vm435 = vcmp.lt.s32.totalorder %v204, 31
      %v436 = vsel %vm435, %v432, %v434
      %v437 = vsel %vm435, %v434, %v432
      %s438 = scalar_lea.vmem [#allocation5], 88
      %v439 = vld [vmem:[%s438] sm:$0xff]
      %v442 = vrot.slane %v436, 4
      %v443 = vsel %vm76, %v437, %v442
      %v445 = vmul.f32 %v439, %v443
      %v446 = vadd.f32 %v425, %v445
      %447 = vst [vmem:[#allocation1] ss:$2 sm:$0xff] %v192
      %v448 = vld.sshfl [vmem:[#allocation1] sm:$0xff pattern:$0x75316420]
      %v449 = vld.sshfl [vmem:[#allocation1 + $0x8] sm:$0xff pattern:$0x75316420]
      %452 = vrot.lane.b32.xlu0 %v448, 30
      %v453 = vpop.permute.xlu0 %452
      %454 = vrot.lane.b32.xlu0 %v449, 30
      %v455 = vpop.permute.xlu0 %454
      %vm456 = vcmp.lt.s32.totalorder %v204, 30
      %v457 = vsel %vm456, %v453, %v455
      %v458 = vsel %vm456, %v455, %v453
      %s459 = scalar_lea.vmem [#allocation5], 96
      %v460 = vld [vmem:[%s459] sm:$0xff]
      %v463 = vrot.slane %v457, 4
      %v464 = vsel %vm76, %v458, %v463
      %v466 = vmul.f32 %v460, %v464
      %v467 = vadd.f32 %v446, %v466
      %468 = vst [vmem:[#allocation1] ss:$2 sm:$0xff] %v192
      %v469 = vld.sshfl [vmem:[#allocation1] sm:$0xff pattern:$0x75316420]
      %v470 = vld.sshfl [vmem:[#allocation1 + $0x8] sm:$0xff pattern:$0x75316420]
      %473 = vrot.lane.b32.xlu0 %v469, 29
      %v474 = vpop.permute.xlu0 %473
      %475 = vrot.lane.b32.xlu0 %v470, 29
      %v476 = vpop.permute.xlu0 %475
      %vm477 = vcmp.lt.s32.totalorder %v204, 29
      %v478 = vsel %vm477, %v474, %v476
      %v479 = vsel %vm477, %v476, %v474
      %s480 = scalar_lea.vmem [#allocation5], 104
      %v481 = vld [vmem:[%s480] sm:$0xff]
      %v484 = vrot.slane %v478, 4
      %v485 = vsel %vm76, %v479, %v484
      %v487 = vmul.f32 %v481, %v485
      %v488 = vadd.f32 %v467, %v487
      %489 = vst [vmem:[#allocation1] ss:$2 sm:$0xff] %v192
      %v490 = vld.sshfl [vmem:[#allocation1] sm:$0xff pattern:$0x75316420]
      %v491 = vld.sshfl [vmem:[#allocation1 + $0x8] sm:$0xff pattern:$0x75316420]
      %494 = vrot.lane.b32.xlu0 %v490, 19
      %v495 = vpop.permute.xlu0 %494
      %496 = vrot.lane.b32.xlu0 %v491, 19
      %v497 = vpop.permute.xlu0 %496
      %vm498 = vcmp.lt.s32.totalorder %v204, 19
      %v499 = vsel %vm498, %v495, %v497
      %v500 = vsel %vm498, %v497, %v495
      %s501 = scalar_lea.vmem [#allocation5], 112
      %v502 = vld [vmem:[%s501] sm:$0xff]
      %v505 = vrot.slane %v499, 4
      %v506 = vsel %vm76, %v500, %v505
      %v508 = vmul.f32 %v502, %v506
      %v509 = vadd.f32 %v488, %v508
      %510 = vst [vmem:[#allocation1] ss:$2 sm:$0xff] %v192
      %v511 = vld.sshfl [vmem:[#allocation1] sm:$0xff pattern:$0x75316420]
      %v512 = vld.sshfl [vmem:[#allocation1 + $0x8] sm:$0xff pattern:$0x75316420]
      %515 = vrot.lane.b32.xlu0 %v511, 18
      %v516 = vpop.permute.xlu0 %515
      %517 = vrot.lane.b32.xlu0 %v512, 18
      %v518 = vpop.permute.xlu0 %517
      %vm519 = vcmp.lt.s32.totalorder %v204, 18
      %v520 = vsel %vm519, %v516, %v518
      %v521 = vsel %vm519, %v518, %v516
      %s522 = scalar_lea.vmem [#allocation5], 120
      %v523 = vld [vmem:[%s522] sm:$0xff]
      %v526 = vrot.slane %v520, 4
      %v527 = vsel %vm76, %v521, %v526
      %v529 = vmul.f32 %v523, %v527
      %v530 = vadd.f32 %v509, %v529
      %531 = vst [vmem:[#allocation1] ss:$2 sm:$0xff] %v192
      %v532 = vld.sshfl [vmem:[#allocation1] sm:$0xff pattern:$0x75316420]
      %v533 = vld.sshfl [vmem:[#allocation1 + $0x8] sm:$0xff pattern:$0x75316420]
      %536 = vrot.lane.b32.xlu0 %v532, 17
      %v537 = vpop.permute.xlu0 %536
      %538 = vrot.lane.b32.xlu0 %v533, 17
      %v539 = vpop.permute.xlu0 %538
      %vm540 = vcmp.lt.s32.totalorder %v204, 17
      %v541 = vsel %vm540, %v537, %v539
      %v542 = vsel %vm540, %v539, %v537
      %s543 = scalar_lea.vmem [#allocation5], 128
      %v544 = vld [vmem:[%s543] sm:$0xff]
      %v547 = vrot.slane %v541, 4
      %v548 = vsel %vm76, %v542, %v547
      %v550 = vmul.f32 %v544, %v548
      %v551 = vadd.f32 %v530, %v550
      %552 = vst [vmem:[#allocation1] ss:$2 sm:$0xff] %v192
      %v553 = vld.sshfl [vmem:[#allocation1] sm:$0xff pattern:$0x75316420]
      %v554 = vld.sshfl [vmem:[#allocation1 + $0x8] sm:$0xff pattern:$0x75316420]
      %557 = vrot.lane.b32.xlu0 %v553, 16
      %v558 = vpop.permute.xlu0 %557
      %559 = vrot.lane.b32.xlu0 %v554, 16
      %v560 = vpop.permute.xlu0 %559
      %vm561 = vcmp.lt.s32.totalorder %v204, 16
      %v562 = vsel %vm561, %v558, %v560
      %v563 = vsel %vm561, %v560, %v558
      %s564 = scalar_lea.vmem [#allocation5], 136
      %v565 = vld [vmem:[%s564] sm:$0xff]
      %v568 = vrot.slane %v562, 4
      %v569 = vsel %vm76, %v563, %v568
      %v571 = vmul.f32 %v565, %v569
      %v572 = vadd.f32 %v551, %v571
      %573 = vst [vmem:[#allocation1] ss:$2 sm:$0xff] %v192
      %v574 = vld.sshfl [vmem:[#allocation1] sm:$0xff pattern:$0x75316420]
      %v575 = vld.sshfl [vmem:[#allocation1 + $0x8] sm:$0xff pattern:$0x75316420]
      %578 = vrot.lane.b32.xlu0 %v574, 15
      %v579 = vpop.permute.xlu0 %578
      %580 = vrot.lane.b32.xlu0 %v575, 15
      %v581 = vpop.permute.xlu0 %580
      %vm582 = vcmp.lt.s32.totalorder %v204, 15
      %v583 = vsel %vm582, %v579, %v581
      %v584 = vsel %vm582, %v581, %v579
      %s585 = scalar_lea.vmem [#allocation5], 144
      %v586 = vld [vmem:[%s585] sm:$0xff]
      %v589 = vrot.slane %v583, 4
      %v590 = vsel %vm76, %v584, %v589
      %v592 = vmul.f32 %v586, %v590
      %v593 = vadd.f32 %v572, %v592
      %594 = vst [vmem:[#allocation1] ss:$2 sm:$0xff] %v192
      %v595 = vld.sshfl [vmem:[#allocation1] sm:$0xff pattern:$0x75316420]
      %v596 = vld.sshfl [vmem:[#allocation1 + $0x8] sm:$0xff pattern:$0x75316420]
      %599 = vrot.lane.b32.xlu0 %v595, 14
      %v600 = vpop.permute.xlu0 %599
      %601 = vrot.lane.b32.xlu0 %v596, 14
      %v602 = vpop.permute.xlu0 %601
      %vm603 = vcmp.lt.s32.totalorder %v204, 14
      %v604 = vsel %vm603, %v600, %v602
      %v605 = vsel %vm603, %v602, %v600
      %s606 = scalar_lea.vmem [#allocation5], 152
      %v607 = vld [vmem:[%s606] sm:$0xff]
      %v610 = vrot.slane %v604, 4
      %v611 = vsel %vm76, %v605, %v610
      %v613 = vmul.f32 %v607, %v611
      %v614 = vadd.f32 %v593, %v613
      %615 = vst [vmem:[#allocation1] ss:$2 sm:$0xff] %v192
      %v616 = vld.sshfl [vmem:[#allocation1] sm:$0xff pattern:$0x75316420]
      %v617 = vld.sshfl [vmem:[#allocation1 + $0x8] sm:$0xff pattern:$0x75316420]
      %620 = vrot.lane.b32.xlu0 %v616, 13
      %v621 = vpop.permute.xlu0 %620
      %622 = vrot.lane.b32.xlu0 %v617, 13
      %v623 = vpop.permute.xlu0 %622
      %vm624 = vcmp.lt.s32.totalorder %v204, 13
      %v625 = vsel %vm624, %v621, %v623
      %v626 = vsel %vm624, %v623, %v621
      %s627 = scalar_lea.vmem [#allocation5], 160
      %v628 = vld [vmem:[%s627] sm:$0xff]
      %v631 = vrot.slane %v625, 4
      %v632 = vsel %vm76, %v626, %v631
      %v634 = vmul.f32 %v628, %v632
      %v635 = vadd.f32 %v614, %v634
      %636 = vst [vmem:[#allocation1] ss:$2 sm:$0xff] %v192
      %v637 = vld.sshfl [vmem:[#allocation1] sm:$0xff pattern:$0x75316420]
      %v638 = vld.sshfl [vmem:[#allocation1 + $0x8] sm:$0xff pattern:$0x75316420]
      %641 = vrot.lane.b32.xlu0 %v637, 3
      %v642 = vpop.permute.xlu0 %641
      %643 = vrot.lane.b32.xlu0 %v638, 3
      %v644 = vpop.permute.xlu0 %643
      %vm645 = vcmp.lt.s32.totalorder %v204, 3
      %v646 = vsel %vm645, %v642, %v644
      %v647 = vsel %vm645, %v644, %v642
      %s648 = scalar_lea.vmem [#allocation5], 168
      %v649 = vld [vmem:[%s648] sm:$0xff]
      %v652 = vrot.slane %v646, 4
      %v653 = vsel %vm76, %v647, %v652
      %v655 = vmul.f32 %v649, %v653
      %v656 = vadd.f32 %v635, %v655
      %657 = vst [vmem:[#allocation1] ss:$2 sm:$0xff] %v192
      %v658 = vld.sshfl [vmem:[#allocation1] sm:$0xff pattern:$0x75316420]
      %v659 = vld.sshfl [vmem:[#allocation1 + $0x8] sm:$0xff pattern:$0x75316420]
      %662 = vrot.lane.b32.xlu0 %v658, 2
      %v663 = vpop.permute.xlu0 %662
      %664 = vrot.lane.b32.xlu0 %v659, 2
      %v665 = vpop.permute.xlu0 %664
      %vm666 = vcmp.lt.s32.totalorder %v204, 2
      %v667 = vsel %vm666, %v663, %v665
      %v668 = vsel %vm666, %v665, %v663
      %s669 = scalar_lea.vmem [#allocation5], 176
      %v670 = vld [vmem:[%s669] sm:$0xff]
      %v673 = vrot.slane %v667, 4
      %v674 = vsel %vm76, %v668, %v673
      %v676 = vmul.f32 %v670, %v674
      %v677 = vadd.f32 %v656, %v676
      %678 = vst [vmem:[#allocation1] ss:$2 sm:$0xff] %v192
      %v679 = vld.sshfl [vmem:[#allocation1] sm:$0xff pattern:$0x75316420]
      %v680 = vld.sshfl [vmem:[#allocation1 + $0x8] sm:$0xff pattern:$0x75316420]
      %683 = vrot.lane.b32.xlu0 %v679, 1
      %v684 = vpop.permute.xlu0 %683
      %685 = vrot.lane.b32.xlu0 %v680, 1
      %v686 = vpop.permute.xlu0 %685
      %vm687 = vcmp.lt.s32.totalorder %v204, 1
      %v688 = vsel %vm687, %v684, %v686
      %v689 = vsel %vm687, %v686, %v684
      %s690 = scalar_lea.vmem [#allocation5], 184
      %v691 = vld [vmem:[%s690] sm:$0xff]
      %v694 = vrot.slane %v688, 4
      %v695 = vsel %vm76, %v689, %v694
      %v697 = vmul.f32 %v691, %v695
      %v698 = vadd.f32 %v677, %v697
      %699 = vst [vmem:[#allocation1] ss:$2 sm:$0xff] %v192
      %v700 = vld.sshfl [vmem:[#allocation1] sm:$0xff pattern:$0x75316420]
      %v701 = vld.sshfl [vmem:[#allocation1 + $0x8] sm:$0xff pattern:$0x75316420]
      %s702 = scalar_lea.vmem [#allocation5], 192
      %v703 = vld [vmem:[%s702] sm:$0xff]
      %v704 = vrot.slane %v701, 4
      %v705 = vsel %vm76, %v700, %v704
      %v707 = vmul.f32 %v703, %v705
      %v708 = vadd.f32 %v698, %v707
      %709 = vst [vmem:[#allocation1] ss:$2 sm:$0xff] %v192
      %v710 = vld.sshfl [vmem:[#allocation1] sm:$0xff pattern:$0x75316420]
      %v711 = vld.sshfl [vmem:[#allocation1 + $0x8] sm:$0xff pattern:$0x75316420]
      %714 = vrot.lane.b32.xlu0 %v710, 127
      %v715 = vpop.permute.xlu0 %714
      %716 = vrot.lane.b32.xlu0 %v711, 127
      %v717 = vpop.permute.xlu0 %716
      %vm718 = vcmp.lt.s32.totalorder %v204, 127
      %v719 = vsel %vm718, %v715, %v717
      %v720 = vsel %vm718, %v717, %v715
      %s721 = scalar_lea.vmem [#allocation5], 200
      %v722 = vld [vmem:[%s721] sm:$0xff]
      %v725 = vrot.slane %v720, 4
      %v726 = vsel %vm76, %v719, %v725
      %v728 = vmul.f32 %v722, %v726
      %v729 = vadd.f32 %v708, %v728
      %730 = vst [vmem:[#allocation1] ss:$2 sm:$0xff] %v192
      %v731 = vld.sshfl [vmem:[#allocation1] sm:$0xff pattern:$0x75316420]
      %v732 = vld.sshfl [vmem:[#allocation1 + $0x8] sm:$0xff pattern:$0x75316420]
      %735 = vrot.lane.b32.xlu0 %v731, 126
      %v736 = vpop.permute.xlu0 %735
      %737 = vrot.lane.b32.xlu0 %v732, 126
      %v738 = vpop.permute.xlu0 %737
      %vm739 = vcmp.lt.s32.totalorder %v204, 126
      %v740 = vsel %vm739, %v736, %v738
      %v741 = vsel %vm739, %v738, %v736
      %s742 = scalar_lea.vmem [#allocation5], 208
      %v743 = vld [vmem:[%s742] sm:$0xff]
      %v746 = vrot.slane %v741, 4
      %v747 = vsel %vm76, %v740, %v746
      %v749 = vmul.f32 %v743, %v747
      %v750 = vadd.f32 %v729, %v749
      %751 = vst [vmem:[#allocation1] ss:$2 sm:$0xff] %v192
      %v752 = vld.sshfl [vmem:[#allocation1] sm:$0xff pattern:$0x75316420]
      %v753 = vld.sshfl [vmem:[#allocation1 + $0x8] sm:$0xff pattern:$0x75316420]
      %756 = vrot.lane.b32.xlu0 %v752, 125
      %v757 = vpop.permute.xlu0 %756
      %758 = vrot.lane.b32.xlu0 %v753, 125
      %v759 = vpop.permute.xlu0 %758
      %vm760 = vcmp.lt.s32.totalorder %v204, 125
      %v761 = vsel %vm760, %v757, %v759
      %v762 = vsel %vm760, %v759, %v757
      %s763 = scalar_lea.vmem [#allocation5], 216
      %v764 = vld [vmem:[%s763] sm:$0xff]
      %v767 = vrot.slane %v762, 4
      %v768 = vsel %vm76, %v761, %v767
      %v770 = vmul.f32 %v764, %v768
      %v771 = vadd.f32 %v750, %v770
      %772 = vst [vmem:[#allocation1] ss:$2 sm:$0xff] %v192
      %v773 = vld.sshfl [vmem:[#allocation1] sm:$0xff pattern:$0x75316420]
      %v774 = vld.sshfl [vmem:[#allocation1 + $0x8] sm:$0xff pattern:$0x75316420]
      %777 = vrot.lane.b32.xlu0 %v773, 115
      %v778 = vpop.permute.xlu0 %777
      %779 = vrot.lane.b32.xlu0 %v774, 115
      %v780 = vpop.permute.xlu0 %779
      %vm781 = vcmp.lt.s32.totalorder %v204, 115
      %v782 = vsel %vm781, %v778, %v780
      %v783 = vsel %vm781, %v780, %v778
      %s784 = scalar_lea.vmem [#allocation5], 224
      %v785 = vld [vmem:[%s784] sm:$0xff]
      %v788 = vrot.slane %v783, 4
      %v789 = vsel %vm76, %v782, %v788
      %v791 = vmul.f32 %v785, %v789
      %v792 = vadd.f32 %v771, %v791
      %793 = vst [vmem:[#allocation1] ss:$2 sm:$0xff] %v192
      %v794 = vld.sshfl [vmem:[#allocation1] sm:$0xff pattern:$0x75316420]
      %v795 = vld.sshfl [vmem:[#allocation1 + $0x8] sm:$0xff pattern:$0x75316420]
      %798 = vrot.lane.b32.xlu0 %v794, 114
      %v799 = vpop.permute.xlu0 %798
      %800 = vrot.lane.b32.xlu0 %v795, 114
      %v801 = vpop.permute.xlu0 %800
      %vm802 = vcmp.lt.s32.totalorder %v204, 114
      %v803 = vsel %vm802, %v799, %v801
      %v804 = vsel %vm802, %v801, %v799
      %s805 = scalar_lea.vmem [#allocation5], 232
      %v806 = vld [vmem:[%s805] sm:$0xff]
      %v809 = vrot.slane %v804, 4
      %v810 = vsel %vm76, %v803, %v809
      %v812 = vmul.f32 %v806, %v810
      %v813 = vadd.f32 %v792, %v812
      %814 = vst [vmem:[#allocation1] ss:$2 sm:$0xff] %v192
      %v815 = vld.sshfl [vmem:[#allocation1] sm:$0xff pattern:$0x75316420]
      %v816 = vld.sshfl [vmem:[#allocation1 + $0x8] sm:$0xff pattern:$0x75316420]
      %819 = vrot.lane.b32.xlu0 %v815, 113
      %v820 = vpop.permute.xlu0 %819
      %821 = vrot.lane.b32.xlu0 %v816, 113
      %v822 = vpop.permute.xlu0 %821
      %vm823 = vcmp.lt.s32.totalorder %v204, 113
      %v824 = vsel %vm823, %v820, %v822
      %v825 = vsel %vm823, %v822, %v820
      %s826 = scalar_lea.vmem [#allocation5], 240
      %v827 = vld [vmem:[%s826] sm:$0xff]
      %v830 = vrot.slane %v825, 4
      %v831 = vsel %vm76, %v824, %v830
      %v833 = vmul.f32 %v827, %v831
      %v834 = vadd.f32 %v813, %v833
      %835 = vst [vmem:[#allocation1] ss:$2 sm:$0xff] %v192
      %v836 = vld.sshfl [vmem:[#allocation1] sm:$0xff pattern:$0x75316420]
      %v837 = vld.sshfl [vmem:[#allocation1 + $0x8] sm:$0xff pattern:$0x75316420]
      %840 = vrot.lane.b32.xlu0 %v836, 112
      %v841 = vpop.permute.xlu0 %840
      %842 = vrot.lane.b32.xlu0 %v837, 112
      %v843 = vpop.permute.xlu0 %842
      %vm844 = vcmp.lt.s32.totalorder %v204, 112
      %v845 = vsel %vm844, %v841, %v843
      %v846 = vsel %vm844, %v843, %v841
      %s847 = scalar_lea.vmem [#allocation5], 248
      %v848 = vld [vmem:[%s847] sm:$0xff]
      %v851 = vrot.slane %v846, 4
      %v852 = vsel %vm76, %v845, %v851
      %v854 = vmul.f32 %v848, %v852
      %v855 = vadd.f32 %v834, %v854
      %856 = vst [vmem:[#allocation1] ss:$2 sm:$0xff] %v192
      %v857 = vld.sshfl [vmem:[#allocation1] sm:$0xff pattern:$0x75316420]
      %v858 = vld.sshfl [vmem:[#allocation1 + $0x8] sm:$0xff pattern:$0x75316420]
      %861 = vrot.lane.b32.xlu0 %v857, 111
      %v862 = vpop.permute.xlu0 %861
      %863 = vrot.lane.b32.xlu0 %v858, 111
      %v864 = vpop.permute.xlu0 %863
      %vm865 = vcmp.lt.s32.totalorder %v204, 111
      %v866 = vsel %vm865, %v862, %v864
      %v867 = vsel %vm865, %v864, %v862
      %s868 = scalar_lea.vmem [#allocation5], 256
      %v869 = vld [vmem:[%s868] sm:$0xff]
      %v872 = vrot.slane %v867, 4
      %v873 = vsel %vm76, %v866, %v872
      %v875 = vmul.f32 %v869, %v873
      %v876 = vadd.f32 %v855, %v875
      %877 = vst [vmem:[#allocation1] ss:$2 sm:$0xff] %v192
      %v878 = vld.sshfl [vmem:[#allocation1] sm:$0xff pattern:$0x75316420]
      %v879 = vld.sshfl [vmem:[#allocation1 + $0x8] sm:$0xff pattern:$0x75316420]
      %882 = vrot.lane.b32.xlu0 %v878, 110
      %v883 = vpop.permute.xlu0 %882
      %884 = vrot.lane.b32.xlu0 %v879, 110
      %v885 = vpop.permute.xlu0 %884
      %vm886 = vcmp.lt.s32.totalorder %v204, 110
      %v887 = vsel %vm886, %v883, %v885
      %v888 = vsel %vm886, %v885, %v883
      %s889 = scalar_lea.vmem [#allocation5], 264
      %v890 = vld [vmem:[%s889] sm:$0xff]
      %v893 = vrot.slane %v888, 4
      %v894 = vsel %vm76, %v887, %v893
      %v896 = vmul.f32 %v890, %v894
      %v897 = vadd.f32 %v876, %v896
      %898 = vst [vmem:[#allocation1] ss:$2 sm:$0xff] %v192
      %v899 = vld.sshfl [vmem:[#allocation1] sm:$0xff pattern:$0x75316420]
      %v900 = vld.sshfl [vmem:[#allocation1 + $0x8] sm:$0xff pattern:$0x75316420]
      %903 = vrot.lane.b32.xlu0 %v899, 109
      %v904 = vpop.permute.xlu0 %903
      %905 = vrot.lane.b32.xlu0 %v900, 109
      %v906 = vpop.permute.xlu0 %905
      %vm907 = vcmp.lt.s32.totalorder %v204, 109
      %v908 = vsel %vm907, %v904, %v906
      %v909 = vsel %vm907, %v906, %v904
      %s910 = scalar_lea.vmem [#allocation5], 272
      %v911 = vld [vmem:[%s910] sm:$0xff]
      %v914 = vrot.slane %v909, 4
      %v915 = vsel %vm76, %v908, %v914
      %v917 = vmul.f32 %v911, %v915
      %v918 = vadd.f32 %v897, %v917
      %919 = vst [vmem:[#allocation1] ss:$2 sm:$0xff] %v192
      %v920 = vld.sshfl [vmem:[#allocation1] sm:$0xff pattern:$0x75316420]
      %v921 = vld.sshfl [vmem:[#allocation1 + $0x8] sm:$0xff pattern:$0x75316420]
      %924 = vrot.lane.b32.xlu0 %v920, 99
      %v925 = vpop.permute.xlu0 %924
      %926 = vrot.lane.b32.xlu0 %v921, 99
      %v927 = vpop.permute.xlu0 %926
      %vm928 = vcmp.lt.s32.totalorder %v204, 99
      %v929 = vsel %vm928, %v925, %v927
      %v930 = vsel %vm928, %v927, %v925
      %s931 = scalar_lea.vmem [#allocation5], 280
      %v932 = vld [vmem:[%s931] sm:$0xff]
      %v935 = vrot.slane %v930, 4
      %v936 = vsel %vm76, %v929, %v935
      %v938 = vmul.f32 %v932, %v936
      %v939 = vadd.f32 %v918, %v938
      %940 = vst [vmem:[#allocation1] ss:$2 sm:$0xff] %v192
      %v941 = vld.sshfl [vmem:[#allocation1] sm:$0xff pattern:$0x75316420]
      %v942 = vld.sshfl [vmem:[#allocation1 + $0x8] sm:$0xff pattern:$0x75316420]
      %945 = vrot.lane.b32.xlu0 %v941, 98
      %v946 = vpop.permute.xlu0 %945
      %947 = vrot.lane.b32.xlu0 %v942, 98
      %v948 = vpop.permute.xlu0 %947
      %vm949 = vcmp.lt.s32.totalorder %v204, 98
      %v950 = vsel %vm949, %v946, %v948
      %v951 = vsel %vm949, %v948, %v946
      %s952 = scalar_lea.vmem [#allocation5], 288
      %v953 = vld [vmem:[%s952] sm:$0xff]
      %v956 = vrot.slane %v951, 4
      %v957 = vsel %vm76, %v950, %v956
      %v959 = vmul.f32 %v953, %v957
      %v960 = vadd.f32 %v939, %v959
      %961 = vst [vmem:[#allocation1] ss:$2 sm:$0xff] %v192
      %v962 = vld.sshfl [vmem:[#allocation1] sm:$0xff pattern:$0x75316420]
      %v963 = vld.sshfl [vmem:[#allocation1 + $0x8] sm:$0xff pattern:$0x75316420]
      %966 = vrot.lane.b32.xlu0 %v962, 97
      %v967 = vpop.permute.xlu0 %966
      %968 = vrot.lane.b32.xlu0 %v963, 97
      %v969 = vpop.permute.xlu0 %968
      %vm970 = vcmp.lt.s32.totalorder %v204, 97
      %v971 = vsel %vm970, %v967, %v969
      %v972 = vsel %vm970, %v969, %v967
      %s973 = scalar_lea.vmem [#allocation5], 296
      %v974 = vld [vmem:[%s973] sm:$0xff]
      %v977 = vrot.slane %v972, 4
      %v978 = vsel %vm76, %v971, %v977
      %v980 = vmul.f32 %v974, %v978
      %v981 = vadd.f32 %v960, %v980
      %982 = vst [vmem:[#allocation1] ss:$2 sm:$0xff] %v192
      %v983 = vld.sshfl [vmem:[#allocation1] sm:$0xff pattern:$0x75316420]
      %v984 = vld.sshfl [vmem:[#allocation1 + $0x8] sm:$0xff pattern:$0x75316420]
      %987 = vrot.lane.b32.xlu0 %v983, 96
      %v988 = vpop.permute.xlu0 %987
      %989 = vrot.lane.b32.xlu0 %v984, 96
      %v990 = vpop.permute.xlu0 %989
      %vm991 = vcmp.lt.s32.totalorder %v204, 96
      %v992 = vsel %vm991, %v988, %v990
      %v993 = vsel %vm991, %v990, %v988
      %s994 = scalar_lea.vmem [#allocation5], 304
      %v995 = vld [vmem:[%s994] sm:$0xff]
      %v998 = vrot.slane %v993, 4
      %v999 = vsel %vm76, %v992, %v998
      %v1001 = vmul.f32 %v995, %v999
      %v1002 = vadd.f32 %v981, %v1001
      %1003 = vst [vmem:[#allocation1] ss:$2 sm:$0xff] %v192
      %v1004 = vld.sshfl [vmem:[#allocation1] sm:$0xff pattern:$0x75316420]
      %v1005 = vld.sshfl [vmem:[#allocation1 + $0x8] sm:$0xff pattern:$0x75316420]
      %1008 = vrot.lane.b32.xlu0 %v1004, 95
      %v1009 = vpop.permute.xlu0 %1008
      %1010 = vrot.lane.b32.xlu0 %v1005, 95
      %v1011 = vpop.permute.xlu0 %1010
      %vm1012 = vcmp.lt.s32.totalorder %v204, 95
      %v1013 = vsel %vm1012, %v1009, %v1011
      %v1014 = vsel %vm1012, %v1011, %v1009
      %s1015 = scalar_lea.vmem [#allocation5], 312
      %v1016 = vld [vmem:[%s1015] sm:$0xff]
      %v1019 = vrot.slane %v1014, 4
      %v1020 = vsel %vm76, %v1013, %v1019
      %v1022 = vmul.f32 %v1016, %v1020
      %v1023 = vadd.f32 %v1002, %v1022
      %1024 = vst [vmem:[#allocation1] ss:$2 sm:$0xff] %v192
      %v1025 = vld.sshfl [vmem:[#allocation1] sm:$0xff pattern:$0x75316420]
      %v1026 = vld.sshfl [vmem:[#allocation1 + $0x8] sm:$0xff pattern:$0x75316420]
      %1029 = vrot.lane.b32.xlu0 %v1025, 94
      %v1030 = vpop.permute.xlu0 %1029
      %1031 = vrot.lane.b32.xlu0 %v1026, 94
      %v1032 = vpop.permute.xlu0 %1031
      %vm1033 = vcmp.lt.s32.totalorder %v204, 94
      %v1034 = vsel %vm1033, %v1030, %v1032
      %v1035 = vsel %vm1033, %v1032, %v1030
      %s1036 = scalar_lea.vmem [#allocation5], 320
      %v1037 = vld [vmem:[%s1036] sm:$0xff]
      %v1040 = vrot.slane %v1035, 4
      %v1041 = vsel %vm76, %v1034, %v1040
      %v1043 = vmul.f32 %v1037, %v1041
      %v1044 = vadd.f32 %v1023, %v1043
      %1045 = vst [vmem:[#allocation1] ss:$2 sm:$0xff] %v192
      %v1046 = vld.sshfl [vmem:[#allocation1] sm:$0xff pattern:$0x75316420]
      %v1047 = vld.sshfl [vmem:[#allocation1 + $0x8] sm:$0xff pattern:$0x75316420]
      %1050 = vrot.lane.b32.xlu0 %v1046, 93
      %v1051 = vpop.permute.xlu0 %1050
      %1052 = vrot.lane.b32.xlu0 %v1047, 93
      %v1053 = vpop.permute.xlu0 %1052
      %vm1054 = vcmp.lt.s32.totalorder %v204, 93
      %v1055 = vsel %vm1054, %v1051, %v1053
      %v1056 = vsel %vm1054, %v1053, %v1051
      %s1057 = scalar_lea.vmem [#allocation5], 328
      %v1058 = vld [vmem:[%s1057] sm:$0xff]
      %v1061 = vrot.slane %v1056, 4
      %v1062 = vsel %vm76, %v1055, %v1061
      %v1064 = vmul.f32 %v1058, %v1062
      %v1065 = vadd.f32 %v1044, %v1064
      %1066 = vst [vmem:[#allocation1] ss:$2 sm:$0xff] %v192
      %v1067 = vld.sshfl [vmem:[#allocation1] sm:$0xff pattern:$0x75316420]
      %v1068 = vld.sshfl [vmem:[#allocation1 + $0x8] sm:$0xff pattern:$0x75316420]
      %1071 = vrot.lane.b32.xlu0 %v1067, 83
      %v1072 = vpop.permute.xlu0 %1071
      %1073 = vrot.lane.b32.xlu0 %v1068, 83
      %v1074 = vpop.permute.xlu0 %1073
      %vm1075 = vcmp.lt.s32.totalorder %v204, 83
      %v1076 = vsel %vm1075, %v1072, %v1074
      %v1077 = vsel %vm1075, %v1074, %v1072
      %s1078 = scalar_lea.vmem [#allocation5], 336
      %v1079 = vld [vmem:[%s1078] sm:$0xff]
      %v1082 = vrot.slane %v1077, 4
      %v1083 = vsel %vm76, %v1076, %v1082
      %v1085 = vmul.f32 %v1079, %v1083
      %v1086 = vadd.f32 %v1065, %v1085
      %1087 = vst [vmem:[#allocation1] ss:$2 sm:$0xff] %v192
      %v1088 = vld.sshfl [vmem:[#allocation1] sm:$0xff pattern:$0x75316420]
      %v1089 = vld.sshfl [vmem:[#allocation1 + $0x8] sm:$0xff pattern:$0x75316420]
      %1092 = vrot.lane.b32.xlu0 %v1088, 82
      %v1093 = vpop.permute.xlu0 %1092
      %1094 = vrot.lane.b32.xlu0 %v1089, 82
      %v1095 = vpop.permute.xlu0 %1094
      %vm1096 = vcmp.lt.s32.totalorder %v204, 82
      %v1097 = vsel %vm1096, %v1093, %v1095
      %v1098 = vsel %vm1096, %v1095, %v1093
      %s1099 = scalar_lea.vmem [#allocation5], 344
      %v1100 = vld [vmem:[%s1099] sm:$0xff]
      %v1103 = vrot.slane %v1098, 4
      %v1104 = vsel %vm76, %v1097, %v1103
      %v1106 = vmul.f32 %v1100, %v1104
      %v1107 = vadd.f32 %v1086, %v1106
      %1108 = vst [vmem:[#allocation1] ss:$2 sm:$0xff] %v192
      %v1109 = vld.sshfl [vmem:[#allocation1] sm:$0xff pattern:$0x75316420]
      %v1110 = vld.sshfl [vmem:[#allocation1 + $0x8] sm:$0xff pattern:$0x75316420]
      %1113 = vrot.lane.b32.xlu0 %v1109, 81
      %v1114 = vpop.permute.xlu0 %1113
      %1115 = vrot.lane.b32.xlu0 %v1110, 81
      %v1116 = vpop.permute.xlu0 %1115
      %vm1117 = vcmp.lt.s32.totalorder %v204, 81
      %v1118 = vsel %vm1117, %v1114, %v1116
      %v1119 = vsel %vm1117, %v1116, %v1114
      %s1120 = scalar_lea.vmem [#allocation5], 352
      %v1121 = vld [vmem:[%s1120] sm:$0xff]
      %v1124 = vrot.slane %v1119, 4
      %v1125 = vsel %vm76, %v1118, %v1124
      %v1127 = vmul.f32 %v1121, %v1125
      %v1128 = vadd.f32 %v1107, %v1127
      %1129 = vst [vmem:[#allocation1] ss:$2 sm:$0xff] %v192
      %v1130 = vld.sshfl [vmem:[#allocation1] sm:$0xff pattern:$0x75316420]
      %v1131 = vld.sshfl [vmem:[#allocation1 + $0x8] sm:$0xff pattern:$0x75316420]
      %1134 = vrot.lane.b32.xlu0 %v1130, 80
      %v1135 = vpop.permute.xlu0 %1134
      %1136 = vrot.lane.b32.xlu0 %v1131, 80
      %v1137 = vpop.permute.xlu0 %1136
      %vm1138 = vcmp.lt.s32.totalorder %v204, 80
      %v1139 = vsel %vm1138, %v1135, %v1137
      %v1140 = vsel %vm1138, %v1137, %v1135
      %s1141 = scalar_lea.vmem [#allocation5], 360
      %v1142 = vld [vmem:[%s1141] sm:$0xff]
      %v1145 = vrot.slane %v1140, 4
      %v1146 = vsel %vm76, %v1139, %v1145
      %v1148 = vmul.f32 %v1142, %v1146
      %v1149 = vadd.f32 %v1128, %v1148
      %1150 = vst [vmem:[#allocation1] ss:$2 sm:$0xff] %v192
      %v1151 = vld.sshfl [vmem:[#allocation1] sm:$0xff pattern:$0x75316420]
      %v1152 = vld.sshfl [vmem:[#allocation1 + $0x8] sm:$0xff pattern:$0x75316420]
      %1155 = vrot.lane.b32.xlu0 %v1151, 79
      %v1156 = vpop.permute.xlu0 %1155
      %1157 = vrot.lane.b32.xlu0 %v1152, 79
      %v1158 = vpop.permute.xlu0 %1157
      %vm1159 = vcmp.lt.s32.totalorder %v204, 79
      %v1160 = vsel %vm1159, %v1156, %v1158
      %v1161 = vsel %vm1159, %v1158, %v1156
      %s1162 = scalar_lea.vmem [#allocation5], 368
      %v1163 = vld [vmem:[%s1162] sm:$0xff]
      %v1166 = vrot.slane %v1161, 4
      %v1167 = vsel %vm76, %v1160, %v1166
      %v1169 = vmul.f32 %v1163, %v1167
      %v1170 = vadd.f32 %v1149, %v1169
      %1171 = vst [vmem:[#allocation1] ss:$2 sm:$0xff] %v192
      %v1172 = vld.sshfl [vmem:[#allocation1] sm:$0xff pattern:$0x75316420]
      %v1173 = vld.sshfl [vmem:[#allocation1 + $0x8] sm:$0xff pattern:$0x75316420]
      %1176 = vrot.lane.b32.xlu0 %v1172, 78
      %v1177 = vpop.permute.xlu0 %1176
      %1178 = vrot.lane.b32.xlu0 %v1173, 78
      %v1179 = vpop.permute.xlu0 %1178
      %vm1180 = vcmp.lt.s32.totalorder %v204, 78
      %v1181 = vsel %vm1180, %v1177, %v1179
      %v1182 = vsel %vm1180, %v1179, %v1177
      %s1183 = scalar_lea.vmem [#allocation5], 376
      %v1184 = vld [vmem:[%s1183] sm:$0xff]
      %v1187 = vrot.slane %v1182, 4
      %v1188 = vsel %vm76, %v1181, %v1187
      %v1190 = vmul.f32 %v1184, %v1188
      %v1191 = vadd.f32 %v1170, %v1190
      %1192 = vst [vmem:[#allocation1] ss:$2 sm:$0xff] %v192
      %v1193 = vld.sshfl [vmem:[#allocation1] sm:$0xff pattern:$0x75316420]
      %v1194 = vld.sshfl [vmem:[#allocation1 + $0x8] sm:$0xff pattern:$0x75316420]
      %1197 = vrot.lane.b32.xlu0 %v1193, 77
      %v1198 = vpop.permute.xlu0 %1197
      %1199 = vrot.lane.b32.xlu0 %v1194, 77
      %v1200 = vpop.permute.xlu0 %1199
      %vm1201 = vcmp.lt.s32.totalorder %v204, 77
      %v1202 = vsel %vm1201, %v1198, %v1200
      %v1203 = vsel %vm1201, %v1200, %v1198
      %s1204 = scalar_lea.vmem [#allocation5], 384
      %v1205 = vld [vmem:[%s1204] sm:$0xff]
      %v1208 = vrot.slane %v1203, 4
      %v1209 = vsel %vm76, %v1202, %v1208
      %v1211 = vmul.f32 %v1205, %v1209
      %v1212 = vadd.f32 %v1191, %v1211
      %v1214 = vrot.slane %v1212, 5
      %v1215 = vrot.slane %v1214, 4
      %v1217 = vadd.f32 %v1212, %v1215
      %v1218 = vmul.f32 %v1217, 0.5
      %v1219 = vtanh.pop %v1218
      %v1220 = vmul.f32 %v1219, 0.5
      %v1221 = vadd.f32 %v1220, 0.5
      %v1223 = vrot.slane %v1221, 3
      %v1224 = vsel %vm96, %v1221, %v1223
      %1226 = vst.msk [vmem:[#allocation10] sm:$0x3] %vm102, %v1224
      %1227 = vst [vmem:[#allocation1] sm:$0xff] %v1221
      %s1228 = scalar_lea.vmem [#allocation1], 2
      %v1229 = vld [vmem:[%s1228] ss:$4 sm:$0xff]
      %s1231 = scalar_lea.vmem [#allocation10], 2
      %1232 = vst.msk [vmem:[%s1231] sm:$0x3] %vm102, %v1229
    $region25: #{tpu_custom_call.1} parent=1 // pred_fallthru
      _
    // Predicated region
    $region26: #{tpu_custom_call.1} parent=1 // pred_check
      _
    $region27: #{tpu_custom_call.1} parent=1 // pred_check_branch
      %1234 = sbr.rel (0) target = $region29
    $region28: #{tpu_custom_call.1} parent=1 // pred_region
      %1236 = vsyncadd [#allocation7], 0
      %s1237 = sshll.u32 [#allocation10], 4
      %s1238 = int_to_ptr.vmem [resolvable:$true] %s1237
      %s1239 = sshll.u32 %s2, 4
      %s1240 = int_to_ptr.hbm [resolvable:$true] %s1239
      %1245 = dma.vmem_to_hbm [thread:$0]  %s1238, 64, %s1240, [#allocation7], 32, 32, 2
    $region29: #{tpu_custom_call.1} parent=1 // pred_fallthru
      _
    // Predicated region
    $region30: #{tpu_custom_call.1} parent=1 // pred_check
      _
    $region31: #{tpu_custom_call.1} parent=1 // pred_check_branch
      %1247 = sbr.rel (0) target = $region33
    $region32: #{tpu_custom_call.1} parent=1 // pred_region
      %1249 = dma.done [#allocation7], 64
    $region33: #{tpu_custom_call.1} parent=1 // pred_fallthru
      _
    %1250 = vsyncpa [#allocation6], 1
    %1251 = vsyncpa [#allocation9], 1
    %1252 = vsyncpa [#allocation7], 1

</llo_original>
